<compile_context>
chip_gen: v5e
topology: v5e:2x2
jax: 0.10.0
libtpu: 0.0.40
codegen_flags: <defaults>
</compile_context>

<pallas_src>
from functools import partial

import jax
import jax.numpy as jnp
from jax.experimental import pallas as pl
from jax.experimental.pallas import tpu as pltpu


def _cdiv(a, b):
    return -(-a // b)


def memnet_kernel(word_ref, u0_ref, wax_ref, ba_ref, wtaug_ref, bt_ref,
                  wo_ref, bo_ref, out_ref, *, n_hops):
    word = word_ref[...]                       # (BB, L, D) streaming dtype; never upcast wholesale
    BB, L, D = word.shape
    u = u0_ref[...].astype(jnp.float32)        # (BB, D) f32 loop carry
    w_ax = wax_ref[...]                        # (1, D)   word-side attention weight (word dtype)
    b_a = ba_ref[0, 0]                         # scalar attention bias (SMEM)
    w_t_aug = wtaug_ref[...]                   # (D, D+1) = [W_t^T | w_au^T] (word dtype)
    b_t = bt_ref[...]                          # (1, D)   f32
    w_o = wo_ref[...]                          # (D, Cp)  f32, lane-padded classifier
    b_o = bo_ref[...]                          # (1, Cp)  f32

    # Hoisted loop-invariant word-side logits via a batched MXU contraction (q == 1);
    # no (BB, L, D) f32 temporary is ever materialized.
    w_ax3 = jnp.broadcast_to(w_ax.reshape(1, 1, D), (BB, 1, D))
    g_word = jnp.einsum('bqd,bkd->bqk', w_ax3, word,
                        preferred_element_type=jnp.float32) + b_a        # (BB, 1, L)

    for _ in range(n_hops):
        # One MXU pass gives both the affine hop transform (cols :D) and the
        # aspect-side attention logit (last col, w_au fused in by the wrapper).
        h = jnp.dot(u.astype(w_t_aug.dtype), w_t_aug,
                    preferred_element_type=jnp.float32)                  # (BB, D+1)
        g_asp = h[:, D:]                                                 # (BB, 1)

        # tanh bounds logits to [-1, 1] => exp cannot overflow: no max-subtraction.
        g = jnp.tanh(g_word + g_asp[:, :, None])                         # (BB, 1, L)
        e = jnp.exp(g)
        # Softmax normalization on the EUP (approx reciprocal, ~2^-12 relative error).
        a = e * pl.reciprocal(jnp.sum(e, axis=-1, keepdims=True), approx=True)

        # vec[b, d] = sum_l a[b, l] * word[b, l, d] — batched MXU matmul in the word
        # dtype (flash-attention pattern), f32 accumulation, no broadcast temporary.
        vec = jnp.einsum('bqk,bkd->bqd', a.astype(word.dtype), word,
                         preferred_element_type=jnp.float32)             # (BB, 1, D)

        # Exact T-collapse of the torch recurrence (mean commutes with the affine map):
        #   u_{k+1} = vec_k + u_k @ W_t^T + b_t
        u = vec[:, 0, :] + h[:, :D] + b_t                                # (BB, D) f32

    # output_fc on the lane-padded classifier (unmasked store of a (BB, Cp) block).
    out_ref[...] = (jnp.dot(u, w_o, preferred_element_type=jnp.float32)
                    + b_o).astype(out_ref.dtype)


def _pick_block_b(B, L, D, c_pad, emb_itemsize, vmem_budget, two_tc):
    """Largest multiple-of-8 batch block whose working set fits the VMEM budget."""
    # Double-buffered pipelined blocks (word dominates) ...
    per_b = 2 * (L * D * emb_itemsize + D * 4 + c_pad * 4)
    # ... plus f32 in-loop temporaries (g_word/g/e/a, h, vec, u), all O(L) or O(D).
    per_b += 4 * (3 * L + 3 * D + (D + 1))
    # Constant weights are still double-buffered by the pipeline: account for them.
    fixed = 2 * (D * (D + 1) * emb_itemsize + D * emb_itemsize
                 + 4 * (D + D * c_pad + c_pad))
    fixed += 2 * 1024 * 1024                       # Mosaic internal scratch headroom
    bb = max(8, ((vmem_budget - fixed) // max(per_b, 1)) // 8 * 8)
    if two_tc:
        # v7x: guarantee >= 2 batch blocks so the "parallel" axis feeds both TensorCores.
        bb = min(bb, max(8, _cdiv(_cdiv(B, 2), 8) * 8))
    return bb


def memnet_forward(inputs, targets, params, n_hops, *, block_b=None,
                   emb_dtype=jnp.bfloat16, vmem_limit_bytes=None):
    """MemNet forward (eval mode). inputs: (B, L) int32 ids, targets: (B, T) int32 ids."""
    emb = params["embedding"]                            # (V, D) f32
    # TODO(synk): nn.Dropout treated as identity (eval-mode forward); no RNG dropout in kernel.
    # TODO(synk): embedding gather + target mean remain wrapper glue; folding the gather into
    #             the kernel via scalar-prefetched token ids would halve word_emb HBM traffic.
    word_emb = emb[inputs].astype(emb_dtype)             # (B, L, D) dominant HBM stream
    tgt_emb = emb[targets]                               # (B, T, D) f32
    u0 = jnp.mean(tgt_emb, axis=1)                       # (B, D) f32 (T-collapse: only the mean is needed)

    B, L, D = word_emb.shape
    C = params["w_out"].shape[0]
    C_pad = _cdiv(max(C, 1), 128) * 128                  # lane-dense classifier / output width

    # ---- weight re-layout so the kernel does x @ W + b ----
    w_att = params["w_att"]                                          # (1, 2D)
    w_ax = w_att[:, :D].astype(emb_dtype)                            # (1, D) word side
    w_au_col = w_att[:, D:].reshape(D, 1)                            # (D, 1) aspect side
    w_t_aug = jnp.concatenate([params["w_tr"].T, w_au_col],
                              axis=1).astype(emb_dtype)              # (D, D+1)
    b_a = params["b_att"].reshape(1, 1).astype(jnp.float32)          # scalar -> SMEM
    b_t = params["b_tr"].reshape(1, D).astype(jnp.float32)           # (1, D)
    w_o = jnp.zeros((D, C_pad), jnp.float32).at[:, :C].set(params["w_out"].T)
    b_o = jnp.zeros((1, C_pad), jnp.float32).at[:, :C].set(params["b_out"].reshape(1, C))

    # ---- VMEM budget, scoped limit, and batch-block size ----
    try:
        vmem_cap = int(pltpu.get_tpu_info().vmem_capacity_bytes)
    except Exception:
        vmem_cap = 128 * 1024 * 1024
    two_tc = vmem_cap <= 96 * 1024 * 1024          # v7x heuristic: 64 MiB VMEM, 2 TensorCores
    if vmem_limit_bytes is None:
        vmem_limit_bytes = min(vmem_cap * 3 // 4, 100 * 1024 * 1024)
    if block_b is None:
        block_b = _pick_block_b(B, L, D, C_pad, jnp.dtype(emb_dtype).itemsize,
                                int(vmem_limit_bytes), two_tc)

    if B <= block_b:
        BB = B                                     # single block, no batch padding
    else:
        BB = max(8, (block_b // 8) * 8)            # keep (8, 128) sublane rule for split blocks
    n_blocks = _cdiv(B, BB)
    Bp = n_blocks * BB
    if Bp != B:
        pad = Bp - B                               # zero-padded rows stay finite and are sliced off
        word_emb = jnp.pad(word_emb, ((0, pad), (0, 0), (0, 0)))
        u0 = jnp.pad(u0, ((0, pad), (0, 0)))

    const = lambda shape: pl.BlockSpec(shape, lambda b, _s=shape: tuple(0 for _ in _s))

    out = pl.pallas_call(
        partial(memnet_kernel, n_hops=n_hops),
        out_shape=jax.ShapeDtypeStruct((Bp, C_pad), jnp.float32),
        grid=(n_blocks,),
        in_specs=[
            pl.BlockSpec((BB, L, D), lambda b: (b, 0, 0)),        # word_emb batch block
            pl.BlockSpec((BB, D), lambda b: (b, 0)),              # u0 batch block
            const((1, D)),                                        # w_ax
            pl.BlockSpec(memory_space=pltpu.MemorySpace.SMEM),    # b_a scalar
            const((D, D + 1)),                                    # w_t_aug = [W_t^T | w_au^T]
            const((1, D)),                                        # b_t
            const((D, C_pad)),                                    # w_o (lane-padded)
            const((1, C_pad)),                                    # b_o (lane-padded)
        ],
        out_specs=pl.BlockSpec((BB, C_pad), lambda b: (b, 0)),    # lane-dense output store
        compiler_params=pltpu.CompilerParams(
            dimension_semantics=("parallel",),
            vmem_limit_bytes=int(vmem_limit_bytes)),
    )(word_emb, u0, w_ax, b_a, w_t_aug, b_t, w_o, b_o)

    return out[:B, :C]


def memnet_reference(inputs, targets, params, n_hops):
    """Pure-JAX reference mirroring the PyTorch forward (eval mode), including the full
    per-hop (B, T, D) transformation (validates the in-kernel T-collapse identity)."""
    emb = params["embedding"]
    word = emb[inputs]                                              # (B, L, D)
    tgt = emb[targets]                                              # (B, T, D)
    D = word.shape[-1]
    u = jnp.mean(tgt, axis=1, keepdims=True)                        # (B, 1, D)
    for _ in range(n_hops):
        att_in = jnp.concatenate(
            [word, jnp.broadcast_to(u, word.shape)], axis=-1)       # (B, L, 2D)
        g = jnp.tanh(att_in @ params["w_att"].T + params["b_att"])  # (B, L, 1)
        a = jax.nn.softmax(g, axis=1)                               # (B, L, 1)
        vec = jnp.einsum("blo,bld->bod", a, word)                   # (B, 1, D)
        tgt = vec + (tgt @ params["w_tr"].T + params["b_tr"])       # (B, T, D)
        u = jnp.mean(tgt, axis=1, keepdims=True)
    return u.reshape(-1, D) @ params["w_out"].T + params["b_out"]


if __name__ == "__main__":
    # Small shapes consistent with the module.
    B, L, T = 12, 8, 4          # batch, sentence length, aspect length
    V, D = 20, 32               # vocab size, word embedding dim
    n_classes, n_hops = 3, 3

    key = jax.random.PRNGKey(0)
    k_emb, k_in, k_tg, k1, k2, k3, k4, k5, k6 = jax.random.split(key, 9)

    params = {
        "embedding": jax.random.normal(k_emb, (V, D), jnp.float32),
        "w_att": jax.random.normal(k1, (1, 2 * D), jnp.float32) * 0.1,
        "b_att": jax.random.normal(k2, (1,), jnp.float32) * 0.1,
        "w_tr": jax.random.normal(k3, (D, D), jnp.float32) * 0.1,
        "b_tr": jax.random.normal(k4, (D,), jnp.float32) * 0.1,
        "w_out": jax.random.normal(k5, (n_classes, D), jnp.float32) * 0.1,
        "b_out": jax.random.normal(k6, (n_classes,), jnp.float32) * 0.1,
    }

    inputs = jax.random.randint(k_in, (B, L), 0, V, dtype=jnp.int32)
    targets = jax.random.randint(k_tg, (B, T), 0, V, dtype=jnp.int32)

    ref = memnet_reference(inputs, targets, params, n_hops)

    # f32 streaming, auto (VMEM-budgeted) batch block.
    out_f32 = jax.block_until_ready(
        memnet_forward(inputs, targets, params, n_hops, emb_dtype=jnp.float32))
    # f32 streaming, forced multi-block grid (BB=8 -> grid=2, batch padded 12 -> 16);
    # exercises padding + the "parallel" batch axis.
    out_f32_mb = jax.block_until_ready(
        memnet_forward(inputs, targets, params, n_hops, block_b=8,
                       emb_dtype=jnp.float32))
    # Default bf16 streaming path (halves word_emb / w_t HBM traffic on every generation).
    out_bf16 = jax.block_until_ready(memnet_forward(inputs, targets, params, n_hops))

    assert out_f32.shape == (B, n_classes), out_f32.shape
    assert out_f32_mb.shape == (B, n_classes), out_f32_mb.shape
    assert out_bf16.shape == (B, n_classes), out_bf16.shape
    # f32 path: only the EUP approximate reciprocal (~2^-12 rel, compounding over n_hops)
    # and MXU rounding separate it from the pure-JAX reference.
    assert jnp.allclose(out_f32, ref, rtol=5e-3, atol=5e-3), (out_f32, ref)
    assert jnp.allclose(out_f32_mb, ref, rtol=5e-3, atol=5e-3), (out_f32_mb, ref)
    # bf16 path: embedding/weight quantization compounds over the hop recurrence -> looser.
    assert jnp.allclose(out_bf16, ref, rtol=1e-1, atol=1e-1), (out_bf16, ref)

    print("KERNEL_OK")
</pallas_src>

<mosaic_0001>
module attributes {stable_mosaic.version = 11 : i64} {
  func.func @memnet_kernel(%arg0: i32, %arg1: memref<12x8x32xf32, #tpu.memory_space<vmem>>, %arg2: memref<12x32xf32, #tpu.memory_space<vmem>>, %arg3: memref<1x32xf32, #tpu.memory_space<vmem>>, %arg4: memref<1x1xf32, #tpu.memory_space<smem>>, %arg5: memref<32x33xf32, #tpu.memory_space<vmem>>, %arg6: memref<1x32xf32, #tpu.memory_space<vmem>>, %arg7: memref<32x128xf32, #tpu.memory_space<vmem>>, %arg8: memref<1x128xf32, #tpu.memory_space<vmem>>, %arg9: memref<12x128xf32, #tpu.memory_space<vmem>>) attributes {dimension_semantics = [#tpu.dimension_semantics<parallel>], iteration_bounds = array<i64: 1>, scalar_prefetch = 0 : i64, scratch_operands = 0 : i64, tpu.core_type = #tpu.core_type<tc>, window_params = [{transform_indices = @transform_0, window_bounds = array<i64: 12, 8, 32>}, {transform_indices = @transform_1, window_bounds = array<i64: 12, 32>}, {pipeline_mode = #tpu.pipeline_mode<synchronous>, transform_indices = @transform_2, window_bounds = array<i64: 1, 32>}, {transform_indices = @transform_3, window_bounds = array<i64: 1, 1>}, {pipeline_mode = #tpu.pipeline_mode<synchronous>, transform_indices = @transform_4, window_bounds = array<i64: 32, 33>}, {pipeline_mode = #tpu.pipeline_mode<synchronous>, transform_indices = @transform_5, window_bounds = array<i64: 1, 32>}, {pipeline_mode = #tpu.pipeline_mode<synchronous>, transform_indices = @transform_6, window_bounds = array<i64: 32, 128>}, {pipeline_mode = #tpu.pipeline_mode<synchronous>, transform_indices = @transform_7, window_bounds = array<i64: 1, 128>}, {transform_indices = @transform_8, window_bounds = array<i64: 12, 128>}]} {
    %c0 = arith.constant 0 : index
    %c0_0 = arith.constant 0 : index
    %c0_1 = arith.constant 0 : index
    %0 = vector.load %arg1[%c0, %c0_0, %c0_1] : memref<12x8x32xf32, #tpu.memory_space<vmem>>, vector<12x8x32xf32>
    %c0_2 = arith.constant 0 : index
    %c0_3 = arith.constant 0 : index
    %1 = vector.load %arg2[%c0_2, %c0_3] : memref<12x32xf32, #tpu.memory_space<vmem>>, vector<12x32xf32>
    %c0_4 = arith.constant 0 : index
    %c0_5 = arith.constant 0 : index
    %2 = vector.load %arg3[%c0_4, %c0_5] : memref<1x32xf32, #tpu.memory_space<vmem>>, vector<1x32xf32>
    %c0_6 = arith.constant 0 : index
    %c0_7 = arith.constant 0 : index
    %3 = memref.load %arg4[%c0_6, %c0_7] : memref<1x1xf32, #tpu.memory_space<smem>>
    %c0_8 = arith.constant 0 : index
    %c0_9 = arith.constant 0 : index
    %4 = vector.load %arg5[%c0_8, %c0_9] : memref<32x33xf32, #tpu.memory_space<vmem>>, vector<32x33xf32>
    %c0_10 = arith.constant 0 : index
    %c0_11 = arith.constant 0 : index
    %5 = vector.load %arg6[%c0_10, %c0_11] : memref<1x32xf32, #tpu.memory_space<vmem>>, vector<1x32xf32>
    %c0_12 = arith.constant 0 : index
    %c0_13 = arith.constant 0 : index
    %6 = vector.load %arg7[%c0_12, %c0_13] : memref<32x128xf32, #tpu.memory_space<vmem>>, vector<32x128xf32>
    %c0_14 = arith.constant 0 : index
    %c0_15 = arith.constant 0 : index
    %7 = vector.load %arg8[%c0_14, %c0_15] : memref<1x128xf32, #tpu.memory_space<vmem>>, vector<1x128xf32>
    %8 = vector.shape_cast %2 : vector<1x32xf32> to vector<1x1x32xf32>
    %9 = vector.shape_cast %8 : vector<1x1x32xf32> to vector<1x1x32xf32>
    %10 = vector.broadcast %9 : vector<1x1x32xf32> to vector<12x1x32xf32>
    "tpu.trace_start"() <{level = 10 : i32, message = "bqd,bkd->bqk"}> : () -> ()
    %cst = arith.constant dense<0.000000e+00> : vector<12x1x8xf32>
    %11 = tpu.matmul %10, %0, %cst {dimension_numbers = #tpu.dot_dimension_numbers<[2], [2], [1], [1], [0, 0, 0, 1, 1, 1], [0], [0]>} : vector<12x1x32xf32>, vector<12x8x32xf32>, vector<12x1x8xf32> -> vector<12x1x8xf32>
    "tpu.trace_stop"() : () -> ()
    %12 = vector.broadcast %3 : f32 to vector<12x1x8xf32>
    %13 = arith.addf %11, %12 : vector<12x1x8xf32>
    %cst_16 = arith.constant dense<0.000000e+00> : vector<12x33xf32>
    %14 = tpu.matmul %1, %4, %cst_16 {dimension_numbers = #tpu.dot_dimension_numbers<[1], [0], [0], [1], [0, 0, 1, 1], [], []>} : vector<12x32xf32>, vector<32x33xf32>, vector<12x33xf32> -> vector<12x33xf32>
    %15 = vector.extract_strided_slice %14 {offsets = [0, 32], sizes = [12, 1], strides = [1, 1]} : vector<12x33xf32> to vector<12x1xf32>
    %16 = vector.shape_cast %15 : vector<12x1xf32> to vector<12x1x1xf32>
    %17 = vector.broadcast %16 : vector<12x1x1xf32> to vector<12x1x8xf32>
    %18 = arith.addf %13, %17 : vector<12x1x8xf32>
    %19 = math.tanh %18 : vector<12x1x8xf32>
    %20 = math.exp %19 : vector<12x1x8xf32>
    %cst_17 = arith.constant dense<0.000000e+00> : vector<12x1xf32>
    %21 = vector.multi_reduction <add>, %20, %cst_17 [2] : vector<12x1x8xf32> to vector<12x1xf32>
    %22 = vector.shape_cast %21 : vector<12x1xf32> to vector<12x1x1xf32>
    %23 = tpu.reciprocal %22 {approx = true} : vector<12x1x1xf32> -> vector<12x1x1xf32>
    %24 = vector.broadcast %23 : vector<12x1x1xf32> to vector<12x1x8xf32>
    %25 = arith.mulf %20, %24 : vector<12x1x8xf32>
    "tpu.trace_start"() <{level = 10 : i32, message = "bqk,bkd->bqd"}> : () -> ()
    %cst_18 = arith.constant dense<0.000000e+00> : vector<12x1x32xf32>
    %26 = tpu.matmul %25, %0, %cst_18 {dimension_numbers = #tpu.dot_dimension_numbers<[2], [1], [1], [2], [0, 0, 0, 1, 1, 2], [0], [0]>} : vector<12x1x8xf32>, vector<12x8x32xf32>, vector<12x1x32xf32> -> vector<12x1x32xf32>
    "tpu.trace_stop"() : () -> ()
    %27 = vector.shape_cast %26 : vector<12x1x32xf32> to vector<12x32xf32>
    %28 = vector.extract_strided_slice %14 {offsets = [0, 0], sizes = [12, 32], strides = [1, 1]} : vector<12x33xf32> to vector<12x32xf32>
    %29 = arith.addf %27, %28 : vector<12x32xf32>
    %30 = vector.broadcast %5 : vector<1x32xf32> to vector<12x32xf32>
    %31 = arith.addf %29, %30 : vector<12x32xf32>
    %cst_19 = arith.constant dense<0.000000e+00> : vector<12x33xf32>
    %32 = tpu.matmul %31, %4, %cst_19 {dimension_numbers = #tpu.dot_dimension_numbers<[1], [0], [0], [1], [0, 0, 1, 1], [], []>} : vector<12x32xf32>, vector<32x33xf32>, vector<12x33xf32> -> vector<12x33xf32>
    %33 = vector.extract_strided_slice %32 {offsets = [0, 32], sizes = [12, 1], strides = [1, 1]} : vector<12x33xf32> to vector<12x1xf32>
    %34 = vector.shape_cast %33 : vector<12x1xf32> to vector<12x1x1xf32>
    %35 = vector.broadcast %34 : vector<12x1x1xf32> to vector<12x1x8xf32>
    %36 = arith.addf %13, %35 : vector<12x1x8xf32>
    %37 = math.tanh %36 : vector<12x1x8xf32>
    %38 = math.exp %37 : vector<12x1x8xf32>
    %cst_20 = arith.constant dense<0.000000e+00> : vector<12x1xf32>
    %39 = vector.multi_reduction <add>, %38, %cst_20 [2] : vector<12x1x8xf32> to vector<12x1xf32>
    %40 = vector.shape_cast %39 : vector<12x1xf32> to vector<12x1x1xf32>
    %41 = tpu.reciprocal %40 {approx = true} : vector<12x1x1xf32> -> vector<12x1x1xf32>
    %42 = vector.broadcast %41 : vector<12x1x1xf32> to vector<12x1x8xf32>
    %43 = arith.mulf %38, %42 : vector<12x1x8xf32>
    "tpu.trace_start"() <{level = 10 : i32, message = "bqk,bkd->bqd"}> : () -> ()
    %cst_21 = arith.constant dense<0.000000e+00> : vector<12x1x32xf32>
    %44 = tpu.matmul %43, %0, %cst_21 {dimension_numbers = #tpu.dot_dimension_numbers<[2], [1], [1], [2], [0, 0, 0, 1, 1, 2], [0], [0]>} : vector<12x1x8xf32>, vector<12x8x32xf32>, vector<12x1x32xf32> -> vector<12x1x32xf32>
    "tpu.trace_stop"() : () -> ()
    %45 = vector.shape_cast %44 : vector<12x1x32xf32> to vector<12x32xf32>
    %46 = vector.extract_strided_slice %32 {offsets = [0, 0], sizes = [12, 32], strides = [1, 1]} : vector<12x33xf32> to vector<12x32xf32>
    %47 = arith.addf %45, %46 : vector<12x32xf32>
    %48 = vector.broadcast %5 : vector<1x32xf32> to vector<12x32xf32>
    %49 = arith.addf %47, %48 : vector<12x32xf32>
    %cst_22 = arith.constant dense<0.000000e+00> : vector<12x33xf32>
    %50 = tpu.matmul %49, %4, %cst_22 {dimension_numbers = #tpu.dot_dimension_numbers<[1], [0], [0], [1], [0, 0, 1, 1], [], []>} : vector<12x32xf32>, vector<32x33xf32>, vector<12x33xf32> -> vector<12x33xf32>
    %51 = vector.extract_strided_slice %50 {offsets = [0, 32], sizes = [12, 1], strides = [1, 1]} : vector<12x33xf32> to vector<12x1xf32>
    %52 = vector.shape_cast %51 : vector<12x1xf32> to vector<12x1x1xf32>
    %53 = vector.broadcast %52 : vector<12x1x1xf32> to vector<12x1x8xf32>
    %54 = arith.addf %13, %53 : vector<12x1x8xf32>
    %55 = math.tanh %54 : vector<12x1x8xf32>
    %56 = math.exp %55 : vector<12x1x8xf32>
    %cst_23 = arith.constant dense<0.000000e+00> : vector<12x1xf32>
    %57 = vector.multi_reduction <add>, %56, %cst_23 [2] : vector<12x1x8xf32> to vector<12x1xf32>
    %58 = vector.shape_cast %57 : vector<12x1xf32> to vector<12x1x1xf32>
    %59 = tpu.reciprocal %58 {approx = true} : vector<12x1x1xf32> -> vector<12x1x1xf32>
    %60 = vector.broadcast %59 : vector<12x1x1xf32> to vector<12x1x8xf32>
    %61 = arith.mulf %56, %60 : vector<12x1x8xf32>
    "tpu.trace_start"() <{level = 10 : i32, message = "bqk,bkd->bqd"}> : () -> ()
    %cst_24 = arith.constant dense<0.000000e+00> : vector<12x1x32xf32>
    %62 = tpu.matmul %61, %0, %cst_24 {dimension_numbers = #tpu.dot_dimension_numbers<[2], [1], [1], [2], [0, 0, 0, 1, 1, 2], [0], [0]>} : vector<12x1x8xf32>, vector<12x8x32xf32>, vector<12x1x32xf32> -> vector<12x1x32xf32>
    "tpu.trace_stop"() : () -> ()
    %63 = vector.shape_cast %62 : vector<12x1x32xf32> to vector<12x32xf32>
    %64 = vector.extract_strided_slice %50 {offsets = [0, 0], sizes = [12, 32], strides = [1, 1]} : vector<12x33xf32> to vector<12x32xf32>
    %65 = arith.addf %63, %64 : vector<12x32xf32>
    %66 = vector.broadcast %5 : vector<1x32xf32> to vector<12x32xf32>
    %67 = arith.addf %65, %66 : vector<12x32xf32>
    %cst_25 = arith.constant dense<0.000000e+00> : vector<12x128xf32>
    %68 = tpu.matmul %67, %6, %cst_25 {dimension_numbers = #tpu.dot_dimension_numbers<[1], [0], [0], [1], [0, 0, 1, 1], [], []>} : vector<12x32xf32>, vector<32x128xf32>, vector<12x128xf32> -> vector<12x128xf32>
    %69 = vector.broadcast %7 : vector<1x128xf32> to vector<12x128xf32>
    %70 = arith.addf %68, %69 : vector<12x128xf32>
    %c0_26 = arith.constant 0 : index
    %c0_27 = arith.constant 0 : index
    %71 = vector.load %arg9[%c0_26, %c0_27] : memref<12x128xf32, #tpu.memory_space<vmem>>, vector<12x128xf32>
    tpu.vector_store %arg9[%c0_26, %c0_27], %70 {strides = array<i32>} : memref<12x128xf32, #tpu.memory_space<vmem>>, vector<12x128xf32>,
    return
  }
  func.func @transform_0(%arg0: i32) -> (i32, i32, i32) {
    %c0_i32 = arith.constant 0 : i32
    %c0_i32_0 = arith.constant 0 : i32
    %c0_i32_1 = arith.constant 0 : i32
    return %arg0, %c0_i32, %c0_i32_0 : i32, i32, i32
  }
  func.func @transform_1(%arg0: i32) -> (i32, i32) {
    %c0_i32 = arith.constant 0 : i32
    %c0_i32_0 = arith.constant 0 : i32
    return %arg0, %c0_i32 : i32, i32
  }
  func.func @transform_2(%arg0: i32) -> (i32, i32) {
    %c0_i32 = arith.constant 0 : i32
    %c0_i32_0 = arith.constant 0 : i32
    %c0_i32_1 = arith.constant 0 : i32
    return %c0_i32, %c0_i32_0 : i32, i32
  }
  func.func @transform_3(%arg0: i32) -> (i32, i32) {
    %c0_i32 = arith.constant 0 : i32
    %c0_i32_0 = arith.constant 0 : i32
    %c0_i32_1 = arith.constant 0 : i32
    return %c0_i32, %c0_i32_0 : i32, i32
  }
  func.func @transform_4(%arg0: i32) -> (i32, i32) {
    %c0_i32 = arith.constant 0 : i32
    %c0_i32_0 = arith.constant 0 : i32
    %c0_i32_1 = arith.constant 0 : i32
    return %c0_i32, %c0_i32_0 : i32, i32
  }
  func.func @transform_5(%arg0: i32) -> (i32, i32) {
    %c0_i32 = arith.constant 0 : i32
    %c0_i32_0 = arith.constant 0 : i32
    %c0_i32_1 = arith.constant 0 : i32
    return %c0_i32, %c0_i32_0 : i32, i32
  }
  func.func @transform_6(%arg0: i32) -> (i32, i32) {
    %c0_i32 = arith.constant 0 : i32
    %c0_i32_0 = arith.constant 0 : i32
    %c0_i32_1 = arith.constant 0 : i32
    return %c0_i32, %c0_i32_0 : i32, i32
  }
  func.func @transform_7(%arg0: i32) -> (i32, i32) {
    %c0_i32 = arith.constant 0 : i32
    %c0_i32_0 = arith.constant 0 : i32
    %c0_i32_1 = arith.constant 0 : i32
    return %c0_i32, %c0_i32_0 : i32, i32
  }
  func.func @transform_8(%arg0: i32) -> (i32, i32) {
    %c0_i32 = arith.constant 0 : i32
    %c0_i32_0 = arith.constant 0 : i32
    return %arg0, %c0_i32 : i32, i32
  }
}

</mosaic_0001>

<llo_original>
// kernel: tpu_custom_call.1
$region0: #{tpu_custom_call.1}
  #allocation0 [shape = 'u32[]', space=smem, size = 0x4, offset = 0x4, fixed_abs, tag = 'smem constant byte address 0x4 - core index']
  #allocation1 [shape = 'u32[72,128]{1,0:T(1,128)}', space=vmem, size = 0x9000, scoped, tag = 'internal scratch']
  #allocation2 [shape = 'f32[1,1]{1,0:T(1,128)S(6)}', space=smem, size = 0x200, scoped, tag = 'scoped memory for tpu_custom_call.1']
  %s0 = inlined_call_operand.hbm [shape: f32[12,8,32], index: 0, kind: input, shape index: {}]
  %s1 = inlined_call_operand.hbm [shape: f32[12,32], index: 1, kind: input, shape index: {}]
  %s2 = inlined_call_operand.vmem [shape: f32[1,32], index: 2, kind: input, shape index: {}]
  %s3 = inlined_call_operand.<no memory space> [shape: f32[1,1], index: 3, kind: input, shape index: {}]
  %s4 = inlined_call_operand.hbm [shape: f32[32,33], index: 4, kind: input, shape index: {}]
  %s5 = inlined_call_operand.vmem [shape: f32[1,32], index: 5, kind: input, shape index: {}]
  %s6 = inlined_call_operand.hbm [shape: f32[32,128], index: 6, kind: input, shape index: {}]
  %s7 = inlined_call_operand.vmem [shape: f32[1,128], index: 7, kind: input, shape index: {}]
  %s8 = inlined_call_operand.hbm [shape: f32[12,128], index: 8, kind: output, shape index: {}]
  %s9 = sld [smem:[#allocation0]]
  $region58: #{tpu_custom_call.1} parent=0
    _
  %s11 = ssub.s32 1, %s9
  %s12 = scalar_select 0, %s11, %s9
  %13 = sst [smem:[#allocation2]] %s3
  $region1: #{tpu_custom_call.1} parent=0
    #allocation3 [shape = 'u8[49152]{0}', space=vmem, size = 0xc000, scoped, tag = 'input window, operand 0, single buffered']
    #allocation4 [shape = 's32[1]{0}', space=sflag, size = 0x4, scoped, tag = 'scoped memory for tpu_custom_call.1']
    #allocation5 [shape = 's32[1]{0}', space=sflag, size = 0x4, scoped, tag = 'scoped memory for tpu_custom_call.1']
    #allocation6 [shape = 'u8[8192]{0}', space=vmem, size = 0x2000, scoped, tag = 'input window, operand 1, single buffered']
    #allocation7 [shape = 's32[1]{0}', space=sflag, size = 0x4, scoped, tag = 'scoped memory for tpu_custom_call.1']
    #allocation8 [shape = 'u8[16384]{0}', space=vmem, size = 0x4000, scoped, tag = 'input window, operand 4, single buffered']
    #allocation9 [shape = 'u8[16384]{0}', space=vmem, size = 0x4000, scoped, tag = 'input window, operand 6, single buffered']
    #allocation10 [shape = 's32[1]{0}', space=sflag, size = 0x4, scoped, tag = 'scoped memory for tpu_custom_call.1']
    #allocation11 [shape = 'u8[8192]{0}', space=vmem, size = 0x2000, scoped, tag = 'output window, operand 0, single buffered']
    %14 = vsyncpa [#allocation4], 0
    %15 = vsyncpa [#allocation7], 0
    %16 = vsyncpa [#allocation10], 0
    %17 = vsyncpa [#allocation5], 0
    // Predicated region
    $region2: #{tpu_custom_call.1} parent=1 // pred_check
      _
    $region3: #{tpu_custom_call.1} parent=1 // pred_check_branch
      %19 = sbr.rel (0) target = $region5
    $region4: #{tpu_custom_call.1} parent=1 // pred_region
      %21 = vsyncadd [#allocation4], 0
      %s22 = sshll.u32 %s0, 4
      %s23 = int_to_ptr.hbm [resolvable:$true] %s22
      %s24 = sshll.u32 [#allocation3], 4
      %s25 = int_to_ptr.vmem [resolvable:$true] %s24
      %30 = dma.hbm_to_vmem [thread:$0]  %s23, 1536, %s25, [#allocation4], 128, 128, 8
    $region5: #{tpu_custom_call.1} parent=1 // pred_fallthru
      _
    // Predicated region
    $region6: #{tpu_custom_call.1} parent=1 // pred_check
      _
    $region7: #{tpu_custom_call.1} parent=1 // pred_check_branch
      %32 = sbr.rel (0) target = $region9
    $region8: #{tpu_custom_call.1} parent=1 // pred_region
      %34 = vsyncadd [#allocation7], 0
      %s35 = sshll.u32 %s1, 4
      %s36 = int_to_ptr.hbm [resolvable:$true] %s35
      %s37 = sshll.u32 [#allocation6], 4
      %s38 = int_to_ptr.vmem [resolvable:$true] %s37
      %43 = dma.hbm_to_vmem [thread:$0]  %s36, 256, %s38, [#allocation7], 128, 128, 8
    $region9: #{tpu_custom_call.1} parent=1 // pred_fallthru
      _
    // Predicated region
    $region10: #{tpu_custom_call.1} parent=1 // pred_check
      _
    $region11: #{tpu_custom_call.1} parent=1 // pred_check_branch
      %45 = sbr.rel (0) target = $region13
    $region12: #{tpu_custom_call.1} parent=1 // pred_region
      _
    $region13: #{tpu_custom_call.1} parent=1 // pred_fallthru
      _
    // Predicated region
    $region14: #{tpu_custom_call.1} parent=1 // pred_check
      _
    $region15: #{tpu_custom_call.1} parent=1 // pred_check_branch
      %47 = sbr.rel (0) target = $region17
    $region16: #{tpu_custom_call.1} parent=1 // pred_region
      _
    $region17: #{tpu_custom_call.1} parent=1 // pred_fallthru
      _
    // Predicated region
    $region18: #{tpu_custom_call.1} parent=1 // pred_check
      _
    $region19: #{tpu_custom_call.1} parent=1 // pred_check_branch
      %49 = sbr.rel (0) target = $region21
    $region20: #{tpu_custom_call.1} parent=1 // pred_region
      %51 = vsyncadd [#allocation7], 0
      %s52 = sshll.u32 %s4, 4
      %s53 = int_to_ptr.hbm [resolvable:$true] %s52
      %s54 = sshll.u32 [#allocation8], 4
      %s55 = int_to_ptr.vmem [resolvable:$true] %s54
      %60 = dma.hbm_to_vmem [thread:$0]  %s53, 512, %s55, [#allocation7], 128, 128, 8
    $region21: #{tpu_custom_call.1} parent=1 // pred_fallthru
      _
    // Predicated region
    $region22: #{tpu_custom_call.1} parent=1 // pred_check
      _
    $region23: #{tpu_custom_call.1} parent=1 // pred_check_branch
      %62 = sbr.rel (0) target = $region25
    $region24: #{tpu_custom_call.1} parent=1 // pred_region
      _
    $region25: #{tpu_custom_call.1} parent=1 // pred_fallthru
      _
    // Predicated region
    $region26: #{tpu_custom_call.1} parent=1 // pred_check
      _
    $region27: #{tpu_custom_call.1} parent=1 // pred_check_branch
      %64 = sbr.rel (0) target = $region29
    $region28: #{tpu_custom_call.1} parent=1 // pred_region
      %66 = vsyncadd [#allocation10], 0
      %s67 = sshll.u32 %s6, 4
      %s68 = int_to_ptr.hbm [resolvable:$true] %s67
      %s69 = sshll.u32 [#allocation9], 4
      %s70 = int_to_ptr.vmem [resolvable:$true] %s69
      %75 = dma.hbm_to_vmem [thread:$0]  %s68, 512, %s70, [#allocation10], 128, 128, 8
    $region29: #{tpu_custom_call.1} parent=1 // pred_fallthru
      _
    // Predicated region
    $region30: #{tpu_custom_call.1} parent=1 // pred_check
      _
    $region31: #{tpu_custom_call.1} parent=1 // pred_check_branch
      %77 = sbr.rel (0) target = $region33
    $region32: #{tpu_custom_call.1} parent=1 // pred_region
      _
    $region33: #{tpu_custom_call.1} parent=1 // pred_fallthru
      _
    // Predicated region
    $region34: #{tpu_custom_call.1} parent=1 // pred_check
      _
    $region35: #{tpu_custom_call.1} parent=1 // pred_check_branch
      %79 = sbr.rel (0) target = $region37
    $region36: #{tpu_custom_call.1} parent=1 // pred_region
      %81 = dma.done [#allocation4], 1536
    $region37: #{tpu_custom_call.1} parent=1 // pred_fallthru
      _
    // Predicated region
    $region38: #{tpu_custom_call.1} parent=1 // pred_check
      _
    $region39: #{tpu_custom_call.1} parent=1 // pred_check_branch
      %83 = sbr.rel (0) target = $region41
    $region40: #{tpu_custom_call.1} parent=1 // pred_region
      %85 = dma.done [#allocation7], 256
    $region41: #{tpu_custom_call.1} parent=1 // pred_fallthru
      _
    // Predicated region
    $region42: #{tpu_custom_call.1} parent=1 // pred_check
      _
    $region43: #{tpu_custom_call.1} parent=1 // pred_check_branch
      %87 = sbr.rel (0) target = $region45
    $region44: #{tpu_custom_call.1} parent=1 // pred_region
      %89 = dma.done [#allocation7], 512
    $region45: #{tpu_custom_call.1} parent=1 // pred_fallthru
      _
    // Predicated region
    $region46: #{tpu_custom_call.1} parent=1 // pred_check
      _
    $region47: #{tpu_custom_call.1} parent=1 // pred_check_branch
      %91 = sbr.rel (0) target = $region49
    $region48: #{tpu_custom_call.1} parent=1 // pred_region
      %93 = dma.done [#allocation10], 512
    $region49: #{tpu_custom_call.1} parent=1 // pred_fallthru
      _
    %v94 = vld [vmem:[#allocation3] sm:$0xff]
    %v95 = vld [vmem:[#allocation3 + $0x8] sm:$0xff]
    %v96 = vld [vmem:[#allocation3 + $0x10] sm:$0xff]
    %v97 = vld [vmem:[#allocation3 + $0x18] sm:$0xff]
    %v98 = vld [vmem:[#allocation3 + $0x20] sm:$0xff]
    %v99 = vld [vmem:[#allocation3 + $0x28] sm:$0xff]
    %v100 = vld [vmem:[#allocation3 + $0x30] sm:$0xff]
    %v101 = vld [vmem:[#allocation3 + $0x38] sm:$0xff]
    %v102 = vld [vmem:[#allocation3 + $0x40] sm:$0xff]
    %v103 = vld [vmem:[#allocation3 + $0x48] sm:$0xff]
    %v104 = vld [vmem:[#allocation3 + $0x50] sm:$0xff]
    %v105 = vld [vmem:[#allocation3 + $0x58] sm:$0xff]
    %v106 = vld [vmem:[#allocation6] sm:$0xff]
    %v107 = vld [vmem:[#allocation6 + $0x8] sm:$0xf]
    %v108 = vld [vmem:[%s2] sm:$0x1]
    %s109 = sld [smem:[#allocation2]]
    %v110 = vld [vmem:[#allocation8] sm:$0xff]
    %v111 = vld [vmem:[#allocation8 + $0x8] sm:$0xff]
    %v112 = vld [vmem:[#allocation8 + $0x10] sm:$0xff]
    %v113 = vld [vmem:[#allocation8 + $0x18] sm:$0xff]
    %v114 = vld [vmem:[%s5] sm:$0x1]
    %v115 = vld [vmem:[#allocation9] sm:$0xff]
    %v116 = vld [vmem:[#allocation9 + $0x8] sm:$0xff]
    %v117 = vld [vmem:[#allocation9 + $0x10] sm:$0xff]
    %v118 = vld [vmem:[#allocation9 + $0x18] sm:$0xff]
    %v119 = vld [vmem:[%s7] sm:$0x1]
    %v120 = vstv %s109
    %vm121 = vcmask 261120
    %v123 = vsel %vm121, %v108, 0
    %v126 = vsel %vm121, %v94, 0
    %128 = vmatpush.xpose.msra.mxu0 0.0
    %129 = vmatpush.xpose.msra.mxu0 0.0
    %130 = vmatpush.xpose.msra.mxu0 0.0
    %131 = vmatpush.xpose.msra.mxu0 0.0
    %132 = vmatpush.xpose.msra.mxu0 0.0
    %133 = vmatpush.xpose.msra.mxu0 0.0
    %134 = vmatpush.xpose.msra.mxu0 0.0
    %135 = vmatpush.xpose.msra.mxu0 0.0
    %136 = vmatpush.xpose.msra.mxu0 0.0
    %137 = vmatpush.xpose.msra.mxu0 0.0
    %138 = vmatpush.xpose.msra.mxu0 0.0
    %139 = vmatpush.xpose.msra.mxu0 0.0
    %140 = vmatpush.xpose.msra.mxu0 0.0
    %141 = vmatpush.xpose.msra.mxu0 0.0
    %142 = vmatpush.xpose.msra.mxu0 0.0
    %143 = vmatpush.xpose.msra.mxu0 %v126
    %144 = vmatmul.f32.gmra.mxu0 %v123
    %v145 = vpop.f32.mrf.mxu0
    %v146 = vadd.f32 %v120, %v145
    %147 = vdwg.mxu0
    %v149 = vsel %vm121, %v95, 0
    %151 = vmatpush.xpose.msra.mxu0 0.0
    %152 = vmatpush.xpose.msra.mxu0 0.0
    %153 = vmatpush.xpose.msra.mxu0 0.0
    %154 = vmatpush.xpose.msra.mxu0 0.0
    %155 = vmatpush.xpose.msra.mxu0 0.0
    %156 = vmatpush.xpose.msra.mxu0 0.0
    %157 = vmatpush.xpose.msra.mxu0 0.0
    %158 = vmatpush.xpose.msra.mxu0 0.0
    %159 = vmatpush.xpose.msra.mxu0 0.0
    %160 = vmatpush.xpose.msra.mxu0 0.0
    %161 = vmatpush.xpose.msra.mxu0 0.0
    %162 = vmatpush.xpose.msra.mxu0 0.0
    %163 = vmatpush.xpose.msra.mxu0 0.0
    %164 = vmatpush.xpose.msra.mxu0 0.0
    %165 = vmatpush.xpose.msra.mxu0 0.0
    %166 = vmatpush.xpose.msra.mxu0 %v149
    %167 = vmatmul.f32.gmra.mxu0 %v123
    %v168 = vpop.f32.mrf.mxu0
    %v169 = vadd.f32 %v120, %v168
    %170 = vdwg.mxu0
    %v172 = vsel %vm121, %v96, 0
    %174 = vmatpush.xpose.msra.mxu0 0.0
    %175 = vmatpush.xpose.msra.mxu0 0.0
    %176 = vmatpush.xpose.msra.mxu0 0.0
    %177 = vmatpush.xpose.msra.mxu0 0.0
    %178 = vmatpush.xpose.msra.mxu0 0.0
    %179 = vmatpush.xpose.msra.mxu0 0.0
    %180 = vmatpush.xpose.msra.mxu0 0.0
    %181 = vmatpush.xpose.msra.mxu0 0.0
    %182 = vmatpush.xpose.msra.mxu0 0.0
    %183 = vmatpush.xpose.msra.mxu0 0.0
    %184 = vmatpush.xpose.msra.mxu0 0.0
    %185 = vmatpush.xpose.msra.mxu0 0.0
    %186 = vmatpush.xpose.msra.mxu0 0.0
    %187 = vmatpush.xpose.msra.mxu0 0.0
    %188 = vmatpush.xpose.msra.mxu0 0.0
    %189 = vmatpush.xpose.msra.mxu0 %v172
    %190 = vmatmul.f32.gmra.mxu0 %v123
    %v191 = vpop.f32.mrf.mxu0
    %v192 = vadd.f32 %v120, %v191
    %193 = vdwg.mxu0
    %v195 = vsel %vm121, %v97, 0
    %197 = vmatpush.xpose.msra.mxu0 0.0
    %198 = vmatpush.xpose.msra.mxu0 0.0
    %199 = vmatpush.xpose.msra.mxu0 0.0
    %200 = vmatpush.xpose.msra.mxu0 0.0
    %201 = vmatpush.xpose.msra.mxu0 0.0
    %202 = vmatpush.xpose.msra.mxu0 0.0
    %203 = vmatpush.xpose.msra.mxu0 0.0
    %204 = vmatpush.xpose.msra.mxu0 0.0
    %205 = vmatpush.xpose.msra.mxu0 0.0
    %206 = vmatpush.xpose.msra.mxu0 0.0
    %207 = vmatpush.xpose.msra.mxu0 0.0
    %208 = vmatpush.xpose.msra.mxu0 0.0
    %209 = vmatpush.xpose.msra.mxu0 0.0
    %210 = vmatpush.xpose.msra.mxu0 0.0
    %211 = vmatpush.xpose.msra.mxu0 0.0
    %212 = vmatpush.xpose.msra.mxu0 %v195
    %213 = vmatmul.f32.gmra.mxu0 %v123
    %v214 = vpop.f32.mrf.mxu0
    %v215 = vadd.f32 %v120, %v214
    %216 = vdwg.mxu0
    %v218 = vsel %vm121, %v98, 0
    %220 = vmatpush.xpose.msra.mxu0 0.0
    %221 = vmatpush.xpose.msra.mxu0 0.0
    %222 = vmatpush.xpose.msra.mxu0 0.0
    %223 = vmatpush.xpose.msra.mxu0 0.0
    %224 = vmatpush.xpose.msra.mxu0 0.0
    %225 = vmatpush.xpose.msra.mxu0 0.0
    %226 = vmatpush.xpose.msra.mxu0 0.0
    %227 = vmatpush.xpose.msra.mxu0 0.0
    %228 = vmatpush.xpose.msra.mxu0 0.0
    %229 = vmatpush.xpose.msra.mxu0 0.0
    %230 = vmatpush.xpose.msra.mxu0 0.0
    %231 = vmatpush.xpose.msra.mxu0 0.0
    %232 = vmatpush.xpose.msra.mxu0 0.0
    %233 = vmatpush.xpose.msra.mxu0 0.0
    %234 = vmatpush.xpose.msra.mxu0 0.0
    %235 = vmatpush.xpose.msra.mxu0 %v218
    %236 = vmatmul.f32.gmra.mxu0 %v123
    %v237 = vpop.f32.mrf.mxu0
    %v238 = vadd.f32 %v120, %v237
    %239 = vdwg.mxu0
    %v241 = vsel %vm121, %v99, 0
    %243 = vmatpush.xpose.msra.mxu0 0.0
    %244 = vmatpush.xpose.msra.mxu0 0.0
    %245 = vmatpush.xpose.msra.mxu0 0.0
    %246 = vmatpush.xpose.msra.mxu0 0.0
    %247 = vmatpush.xpose.msra.mxu0 0.0
    %248 = vmatpush.xpose.msra.mxu0 0.0
    %249 = vmatpush.xpose.msra.mxu0 0.0
    %250 = vmatpush.xpose.msra.mxu0 0.0
    %251 = vmatpush.xpose.msra.mxu0 0.0
    %252 = vmatpush.xpose.msra.mxu0 0.0
    %253 = vmatpush.xpose.msra.mxu0 0.0
    %254 = vmatpush.xpose.msra.mxu0 0.0
    %255 = vmatpush.xpose.msra.mxu0 0.0
    %256 = vmatpush.xpose.msra.mxu0 0.0
    %257 = vmatpush.xpose.msra.mxu0 0.0
    %258 = vmatpush.xpose.msra.mxu0 %v241
    %259 = vmatmul.f32.gmra.mxu0 %v123
    %v260 = vpop.f32.mrf.mxu0
    %v261 = vadd.f32 %v120, %v260
    %262 = vdwg.mxu0
    %v264 = vsel %vm121, %v100, 0
    %266 = vmatpush.xpose.msra.mxu0 0.0
    %267 = vmatpush.xpose.msra.mxu0 0.0
    %268 = vmatpush.xpose.msra.mxu0 0.0
    %269 = vmatpush.xpose.msra.mxu0 0.0
    %270 = vmatpush.xpose.msra.mxu0 0.0
    %271 = vmatpush.xpose.msra.mxu0 0.0
    %272 = vmatpush.xpose.msra.mxu0 0.0
    %273 = vmatpush.xpose.msra.mxu0 0.0
    %274 = vmatpush.xpose.msra.mxu0 0.0
    %275 = vmatpush.xpose.msra.mxu0 0.0
    %276 = vmatpush.xpose.msra.mxu0 0.0
    %277 = vmatpush.xpose.msra.mxu0 0.0
    %278 = vmatpush.xpose.msra.mxu0 0.0
    %279 = vmatpush.xpose.msra.mxu0 0.0
    %280 = vmatpush.xpose.msra.mxu0 0.0
    %281 = vmatpush.xpose.msra.mxu0 %v264
    %282 = vmatmul.f32.gmra.mxu0 %v123
    %v283 = vpop.f32.mrf.mxu0
    %v284 = vadd.f32 %v120, %v283
    %285 = vdwg.mxu0
    %v287 = vsel %vm121, %v101, 0
    %289 = vmatpush.xpose.msra.mxu0 0.0
    %290 = vmatpush.xpose.msra.mxu0 0.0
    %291 = vmatpush.xpose.msra.mxu0 0.0
    %292 = vmatpush.xpose.msra.mxu0 0.0
    %293 = vmatpush.xpose.msra.mxu0 0.0
    %294 = vmatpush.xpose.msra.mxu0 0.0
    %295 = vmatpush.xpose.msra.mxu0 0.0
    %296 = vmatpush.xpose.msra.mxu0 0.0
    %297 = vmatpush.xpose.msra.mxu0 0.0
    %298 = vmatpush.xpose.msra.mxu0 0.0
    %299 = vmatpush.xpose.msra.mxu0 0.0
    %300 = vmatpush.xpose.msra.mxu0 0.0
    %301 = vmatpush.xpose.msra.mxu0 0.0
    %302 = vmatpush.xpose.msra.mxu0 0.0
    %303 = vmatpush.xpose.msra.mxu0 0.0
    %304 = vmatpush.xpose.msra.mxu0 %v287
    %305 = vmatmul.f32.gmra.mxu0 %v123
    %v306 = vpop.f32.mrf.mxu0
    %v307 = vadd.f32 %v120, %v306
    %308 = vdwg.mxu0
    %v310 = vsel %vm121, %v102, 0
    %312 = vmatpush.xpose.msra.mxu0 0.0
    %313 = vmatpush.xpose.msra.mxu0 0.0
    %314 = vmatpush.xpose.msra.mxu0 0.0
    %315 = vmatpush.xpose.msra.mxu0 0.0
    %316 = vmatpush.xpose.msra.mxu0 0.0
    %317 = vmatpush.xpose.msra.mxu0 0.0
    %318 = vmatpush.xpose.msra.mxu0 0.0
    %319 = vmatpush.xpose.msra.mxu0 0.0
    %320 = vmatpush.xpose.msra.mxu0 0.0
    %321 = vmatpush.xpose.msra.mxu0 0.0
    %322 = vmatpush.xpose.msra.mxu0 0.0
    %323 = vmatpush.xpose.msra.mxu0 0.0
    %324 = vmatpush.xpose.msra.mxu0 0.0
    %325 = vmatpush.xpose.msra.mxu0 0.0
    %326 = vmatpush.xpose.msra.mxu0 0.0
    %327 = vmatpush.xpose.msra.mxu0 %v310
    %328 = vmatmul.f32.gmra.mxu0 %v123
    %v329 = vpop.f32.mrf.mxu0
    %v330 = vadd.f32 %v120, %v329
    %331 = vdwg.mxu0
    %v333 = vsel %vm121, %v103, 0
    %335 = vmatpush.xpose.msra.mxu0 0.0
    %336 = vmatpush.xpose.msra.mxu0 0.0
    %337 = vmatpush.xpose.msra.mxu0 0.0
    %338 = vmatpush.xpose.msra.mxu0 0.0
    %339 = vmatpush.xpose.msra.mxu0 0.0
    %340 = vmatpush.xpose.msra.mxu0 0.0
    %341 = vmatpush.xpose.msra.mxu0 0.0
    %342 = vmatpush.xpose.msra.mxu0 0.0
    %343 = vmatpush.xpose.msra.mxu0 0.0
    %344 = vmatpush.xpose.msra.mxu0 0.0
    %345 = vmatpush.xpose.msra.mxu0 0.0
    %346 = vmatpush.xpose.msra.mxu0 0.0
    %347 = vmatpush.xpose.msra.mxu0 0.0
    %348 = vmatpush.xpose.msra.mxu0 0.0
    %349 = vmatpush.xpose.msra.mxu0 0.0
    %350 = vmatpush.xpose.msra.mxu0 %v333
    %351 = vmatmul.f32.gmra.mxu0 %v123
    %v352 = vpop.f32.mrf.mxu0
    %v353 = vadd.f32 %v120, %v352
    %354 = vdwg.mxu0
    %v356 = vsel %vm121, %v104, 0
    %358 = vmatpush.xpose.msra.mxu0 0.0
    %359 = vmatpush.xpose.msra.mxu0 0.0
    %360 = vmatpush.xpose.msra.mxu0 0.0
    %361 = vmatpush.xpose.msra.mxu0 0.0
    %362 = vmatpush.xpose.msra.mxu0 0.0
    %363 = vmatpush.xpose.msra.mxu0 0.0
    %364 = vmatpush.xpose.msra.mxu0 0.0
    %365 = vmatpush.xpose.msra.mxu0 0.0
    %366 = vmatpush.xpose.msra.mxu0 0.0
    %367 = vmatpush.xpose.msra.mxu0 0.0
    %368 = vmatpush.xpose.msra.mxu0 0.0
    %369 = vmatpush.xpose.msra.mxu0 0.0
    %370 = vmatpush.xpose.msra.mxu0 0.0
    %371 = vmatpush.xpose.msra.mxu0 0.0
    %372 = vmatpush.xpose.msra.mxu0 0.0
    %373 = vmatpush.xpose.msra.mxu0 %v356
    %374 = vmatmul.f32.gmra.mxu0 %v123
    %v375 = vpop.f32.mrf.mxu0
    %v376 = vadd.f32 %v120, %v375
    %377 = vdwg.mxu0
    %v379 = vsel %vm121, %v105, 0
    %381 = vmatpush.xpose.msra.mxu0 0.0
    %382 = vmatpush.xpose.msra.mxu0 0.0
    %383 = vmatpush.xpose.msra.mxu0 0.0
    %384 = vmatpush.xpose.msra.mxu0 0.0
    %385 = vmatpush.xpose.msra.mxu0 0.0
    %386 = vmatpush.xpose.msra.mxu0 0.0
    %387 = vmatpush.xpose.msra.mxu0 0.0
    %388 = vmatpush.xpose.msra.mxu0 0.0
    %389 = vmatpush.xpose.msra.mxu0 0.0
    %390 = vmatpush.xpose.msra.mxu0 0.0
    %391 = vmatpush.xpose.msra.mxu0 0.0
    %392 = vmatpush.xpose.msra.mxu0 0.0
    %393 = vmatpush.xpose.msra.mxu0 0.0
    %394 = vmatpush.xpose.msra.mxu0 0.0
    %395 = vmatpush.xpose.msra.mxu0 0.0
    %396 = vmatpush.xpose.msra.mxu0 %v379
    %397 = vmatmul.f32.gmra.mxu0 %v123
    %v398 = vpop.f32.mrf.mxu0
    %v399 = vadd.f32 %v120, %v398
    %400 = vdwg.mxu0
    %v402 = vsel %vm121, %v106, 0
    %v405 = vsel %vm121, %v107, 0
    %407 = vmatpush.msra.mxu0 0.0
    %408 = vmatpush.msra.mxu0 0.0
    %409 = vmatpush.msra.mxu0 0.0
    %410 = vmatpush.msra.mxu0 0.0
    %411 = vmatpush.msra.mxu0 0.0
    %412 = vmatpush.msra.mxu0 0.0
    %413 = vmatpush.msra.mxu0 0.0
    %414 = vmatpush.msra.mxu0 0.0
    %415 = vmatpush.msra.mxu0 0.0
    %416 = vmatpush.msra.mxu0 0.0
    %417 = vmatpush.msra.mxu0 0.0
    %418 = vmatpush.msra.mxu0 0.0
    %419 = vmatpush.msra.mxu0 %v113
    %420 = vmatpush.msra.mxu0 %v112
    %421 = vmatpush.msra.mxu0 %v111
    %422 = vmatpush.msra.mxu0 %v110
    %423 = vmatmul.f32.gmra.mxu0 %v402
    %v424 = vpop.f32.mrf.mxu0
    %v425 = vadd.f32 0.0, %v424
    %426 = vmatmul.f32.gmra.mxu0 %v405
    %v427 = vpop.f32.mrf.mxu0
    %v428 = vadd.f32 0.0, %v427
    %429 = vdwg.mxu0
    %v432 = vrot.slane %v425, 1
    %v433 = vrot.slane %v425, 2
    %v434 = vrot.slane %v425, 3
    %v435 = vrot.slane %v425, 4
    %v436 = vrot.slane %v425, 5
    %v437 = vrot.slane %v425, 6
    %v438 = vrot.slane %v425, 7
    %v439 = vrot.slane %v428, 1
    %v440 = vrot.slane %v428, 2
    %v441 = vrot.slane %v428, 3
    %442 = vset.pattern.permute.xlu0 32
    %443 = vperm.xlu0 %442, %v425
    %v444 = vpop.permute.xlu0 %443
    %v446 = vperm.slane %v444, 0
    %447 = vset.pattern.permute.xlu0 32
    %448 = vperm.xlu0 %447, %v432
    %v449 = vpop.permute.xlu0 %448
    %v451 = vperm.slane %v449, 0
    %452 = vset.pattern.permute.xlu0 32
    %453 = vperm.xlu0 %452, %v433
    %v454 = vpop.permute.xlu0 %453
    %v456 = vperm.slane %v454, 0
    %457 = vset.pattern.permute.xlu0 32
    %458 = vperm.xlu0 %457, %v434
    %v459 = vpop.permute.xlu0 %458
    %v461 = vperm.slane %v459, 0
    %462 = vset.pattern.permute.xlu0 32
    %463 = vperm.xlu0 %462, %v435
    %v464 = vpop.permute.xlu0 %463
    %v466 = vperm.slane %v464, 0
    %467 = vset.pattern.permute.xlu0 32
    %468 = vperm.xlu0 %467, %v436
    %v469 = vpop.permute.xlu0 %468
    %v471 = vperm.slane %v469, 0
    %472 = vset.pattern.permute.xlu0 32
    %473 = vperm.xlu0 %472, %v437
    %v474 = vpop.permute.xlu0 %473
    %v476 = vperm.slane %v474, 0
    %477 = vset.pattern.permute.xlu0 32
    %478 = vperm.xlu0 %477, %v438
    %v479 = vpop.permute.xlu0 %478
    %v481 = vperm.slane %v479, 0
    %482 = vset.pattern.permute.xlu0 32
    %483 = vperm.xlu0 %482, %v428
    %v484 = vpop.permute.xlu0 %483
    %v486 = vperm.slane %v484, 0
    %487 = vset.pattern.permute.xlu0 32
    %488 = vperm.xlu0 %487, %v439
    %v489 = vpop.permute.xlu0 %488
    %v491 = vperm.slane %v489, 0
    %492 = vset.pattern.permute.xlu0 32
    %493 = vperm.xlu0 %492, %v440
    %v494 = vpop.permute.xlu0 %493
    %v496 = vperm.slane %v494, 0
    %497 = vset.pattern.permute.xlu0 32
    %498 = vperm.xlu0 %497, %v441
    %v499 = vpop.permute.xlu0 %498
    %v501 = vperm.slane %v499, 0
    %v502 = vadd.f32 %v146, %v446
    %v503 = vadd.f32 %v169, %v451
    %v504 = vadd.f32 %v192, %v456
    %v505 = vadd.f32 %v215, %v461
    %v506 = vadd.f32 %v238, %v466
    %v507 = vadd.f32 %v261, %v471
    %v508 = vadd.f32 %v284, %v476
    %v509 = vadd.f32 %v307, %v481
    %v510 = vadd.f32 %v330, %v486
    %v511 = vadd.f32 %v353, %v491
    %v512 = vadd.f32 %v376, %v496
    %v513 = vadd.f32 %v399, %v501
    %v514 = vtanh.pop %v502
    %v515 = vtanh.pop %v503
    %v516 = vtanh.pop %v504
    %v517 = vtanh.pop %v505
    %v518 = vtanh.pop %v506
    %v519 = vtanh.pop %v507
    %v520 = vtanh.pop %v508
    %v521 = vtanh.pop %v509
    %v522 = vtanh.pop %v510
    %v523 = vtanh.pop %v511
    %v524 = vtanh.pop %v512
    %v525 = vtanh.pop %v513
    %v526 = vmul.f32 %v514, 1.442695
    %v527 = vpow.pop %v526
    %v528 = vmul.f32 %v515, 1.442695
    %v529 = vpow.pop %v528
    %v530 = vmul.f32 %v516, 1.442695
    %v531 = vpow.pop %v530
    %v532 = vmul.f32 %v517, 1.442695
    %v533 = vpow.pop %v532
    %v534 = vmul.f32 %v518, 1.442695
    %v535 = vpow.pop %v534
    %v536 = vmul.f32 %v519, 1.442695
    %v537 = vpow.pop %v536
    %v538 = vmul.f32 %v520, 1.442695
    %v539 = vpow.pop %v538
    %v540 = vmul.f32 %v521, 1.442695
    %v541 = vpow.pop %v540
    %v542 = vmul.f32 %v522, 1.442695
    %v543 = vpow.pop %v542
    %v544 = vmul.f32 %v523, 1.442695
    %v545 = vpow.pop %v544
    %v546 = vmul.f32 %v524, 1.442695
    %v547 = vpow.pop %v546
    %v548 = vmul.f32 %v525, 1.442695
    %v549 = vpow.pop %v548
    %vm550 = vcmask 57344
    %v551 = vsel %vm550, %v527, 0.0
    %552 = vadd.xlane.f32.xlu0 %v551
    %v553 = vpop.xlane.xlu0 %552
    %v554 = vsel %vm550, %v529, 0.0
    %555 = vadd.xlane.f32.xlu0 %v554
    %v556 = vpop.xlane.xlu0 %555
    %v557 = vsel %vm550, %v531, 0.0
    %558 = vadd.xlane.f32.xlu0 %v557
    %v559 = vpop.xlane.xlu0 %558
    %v560 = vsel %vm550, %v533, 0.0
    %561 = vadd.xlane.f32.xlu0 %v560
    %v562 = vpop.xlane.xlu0 %561
    %v563 = vsel %vm550, %v535, 0.0
    %564 = vadd.xlane.f32.xlu0 %v563
    %v565 = vpop.xlane.xlu0 %564
    %v566 = vsel %vm550, %v537, 0.0
    %567 = vadd.xlane.f32.xlu0 %v566
    %v568 = vpop.xlane.xlu0 %567
    %v569 = vsel %vm550, %v539, 0.0
    %570 = vadd.xlane.f32.xlu0 %v569
    %v571 = vpop.xlane.xlu0 %570
    %v572 = vsel %vm550, %v541, 0.0
    %573 = vadd.xlane.f32.xlu0 %v572
    %v574 = vpop.xlane.xlu0 %573
    %v575 = vsel %vm550, %v543, 0.0
    %576 = vadd.xlane.f32.xlu0 %v575
    %v577 = vpop.xlane.xlu0 %576
    %v578 = vsel %vm550, %v545, 0.0
    %579 = vadd.xlane.f32.xlu0 %v578
    %v580 = vpop.xlane.xlu0 %579
    %v581 = vsel %vm550, %v547, 0.0
    %582 = vadd.xlane.f32.xlu0 %v581
    %v583 = vpop.xlane.xlu0 %582
    %v584 = vsel %vm550, %v549, 0.0
    %585 = vadd.xlane.f32.xlu0 %v584
    %v586 = vpop.xlane.xlu0 %585
    %v587 = vrcp.pop %v553
    %v588 = vrcp.pop %v556
    %v589 = vrcp.pop %v559
    %v590 = vrcp.pop %v562
    %v591 = vrcp.pop %v565
    %v592 = vrcp.pop %v568
    %v593 = vrcp.pop %v571
    %v594 = vrcp.pop %v574
    %v595 = vrcp.pop %v577
    %v596 = vrcp.pop %v580
    %v597 = vrcp.pop %v583
    %v598 = vrcp.pop %v586
    %v599 = vmul.f32 %v527, %v587
    %v600 = vmul.f32 %v529, %v588
    %v601 = vmul.f32 %v531, %v589
    %v602 = vmul.f32 %v533, %v590
    %v603 = vmul.f32 %v535, %v591
    %v604 = vmul.f32 %v537, %v592
    %v605 = vmul.f32 %v539, %v593
    %v606 = vmul.f32 %v541, %v594
    %v607 = vmul.f32 %v543, %v595
    %v608 = vmul.f32 %v545, %v596
    %v609 = vmul.f32 %v547, %v597
    %v610 = vmul.f32 %v549, %v598
    %vm611 = vcmask 64512
    %v613 = vsel %vm611, %v599, 0
    %615 = vmatpush.msra.mxu0 0.0
    %616 = vmatpush.msra.mxu0 0.0
    %617 = vmatpush.msra.mxu0 0.0
    %618 = vmatpush.msra.mxu0 0.0
    %619 = vmatpush.msra.mxu0 0.0
    %620 = vmatpush.msra.mxu0 0.0
    %621 = vmatpush.msra.mxu0 0.0
    %622 = vmatpush.msra.mxu0 0.0
    %623 = vmatpush.msra.mxu0 0.0
    %624 = vmatpush.msra.mxu0 0.0
    %625 = vmatpush.msra.mxu0 0.0
    %626 = vmatpush.msra.mxu0 0.0
    %627 = vmatpush.msra.mxu0 0.0
    %628 = vmatpush.msra.mxu0 0.0
    %629 = vmatpush.msra.mxu0 0.0
    %630 = vmatpush.msra.mxu0 %v94
    %631 = vmatmul.f32.gmra.mxu0 %v613
    %v632 = vpop.f32.mrf.mxu0
    %v633 = vadd.f32 0.0, %v632
    %634 = vdwg.mxu0
    %v636 = vsel %vm611, %v600, 0
    %638 = vmatpush.msra.mxu0 0.0
    %639 = vmatpush.msra.mxu0 0.0
    %640 = vmatpush.msra.mxu0 0.0
    %641 = vmatpush.msra.mxu0 0.0
    %642 = vmatpush.msra.mxu0 0.0
    %643 = vmatpush.msra.mxu0 0.0
    %644 = vmatpush.msra.mxu0 0.0
    %645 = vmatpush.msra.mxu0 0.0
    %646 = vmatpush.msra.mxu0 0.0
    %647 = vmatpush.msra.mxu0 0.0
    %648 = vmatpush.msra.mxu0 0.0
    %649 = vmatpush.msra.mxu0 0.0
    %650 = vmatpush.msra.mxu0 0.0
    %651 = vmatpush.msra.mxu0 0.0
    %652 = vmatpush.msra.mxu0 0.0
    %653 = vmatpush.msra.mxu0 %v95
    %654 = vmatmul.f32.gmra.mxu0 %v636
    %v655 = vpop.f32.mrf.mxu0
    %v656 = vadd.f32 0.0, %v655
    %657 = vdwg.mxu0
    %v659 = vsel %vm611, %v601, 0
    %661 = vmatpush.msra.mxu0 0.0
    %662 = vmatpush.msra.mxu0 0.0
    %663 = vmatpush.msra.mxu0 0.0
    %664 = vmatpush.msra.mxu0 0.0
    %665 = vmatpush.msra.mxu0 0.0
    %666 = vmatpush.msra.mxu0 0.0
    %667 = vmatpush.msra.mxu0 0.0
    %668 = vmatpush.msra.mxu0 0.0
    %669 = vmatpush.msra.mxu0 0.0
    %670 = vmatpush.msra.mxu0 0.0
    %671 = vmatpush.msra.mxu0 0.0
    %672 = vmatpush.msra.mxu0 0.0
    %673 = vmatpush.msra.mxu0 0.0
    %674 = vmatpush.msra.mxu0 0.0
    %675 = vmatpush.msra.mxu0 0.0
    %676 = vmatpush.msra.mxu0 %v96
    %677 = vmatmul.f32.gmra.mxu0 %v659
    %v678 = vpop.f32.mrf.mxu0
    %v679 = vadd.f32 0.0, %v678
    %680 = vdwg.mxu0
    %v682 = vsel %vm611, %v602, 0
    %684 = vmatpush.msra.mxu0 0.0
    %685 = vmatpush.msra.mxu0 0.0
    %686 = vmatpush.msra.mxu0 0.0
    %687 = vmatpush.msra.mxu0 0.0
    %688 = vmatpush.msra.mxu0 0.0
    %689 = vmatpush.msra.mxu0 0.0
    %690 = vmatpush.msra.mxu0 0.0
    %691 = vmatpush.msra.mxu0 0.0
    %692 = vmatpush.msra.mxu0 0.0
    %693 = vmatpush.msra.mxu0 0.0
    %694 = vmatpush.msra.mxu0 0.0
    %695 = vmatpush.msra.mxu0 0.0
    %696 = vmatpush.msra.mxu0 0.0
    %697 = vmatpush.msra.mxu0 0.0
    %698 = vmatpush.msra.mxu0 0.0
    %699 = vmatpush.msra.mxu0 %v97
    %700 = vmatmul.f32.gmra.mxu0 %v682
    %v701 = vpop.f32.mrf.mxu0
    %v702 = vadd.f32 0.0, %v701
    %703 = vdwg.mxu0
    %v705 = vsel %vm611, %v603, 0
    %707 = vmatpush.msra.mxu0 0.0
    %708 = vmatpush.msra.mxu0 0.0
    %709 = vmatpush.msra.mxu0 0.0
    %710 = vmatpush.msra.mxu0 0.0
    %711 = vmatpush.msra.mxu0 0.0
    %712 = vmatpush.msra.mxu0 0.0
    %713 = vmatpush.msra.mxu0 0.0
    %714 = vmatpush.msra.mxu0 0.0
    %715 = vmatpush.msra.mxu0 0.0
    %716 = vmatpush.msra.mxu0 0.0
    %717 = vmatpush.msra.mxu0 0.0
    %718 = vmatpush.msra.mxu0 0.0
    %719 = vmatpush.msra.mxu0 0.0
    %720 = vmatpush.msra.mxu0 0.0
    %721 = vmatpush.msra.mxu0 0.0
    %722 = vmatpush.msra.mxu0 %v98
    %723 = vmatmul.f32.gmra.mxu0 %v705
    %v724 = vpop.f32.mrf.mxu0
    %v725 = vadd.f32 0.0, %v724
    %726 = vdwg.mxu0
    %v728 = vsel %vm611, %v604, 0
    %730 = vmatpush.msra.mxu0 0.0
    %731 = vmatpush.msra.mxu0 0.0
    %732 = vmatpush.msra.mxu0 0.0
    %733 = vmatpush.msra.mxu0 0.0
    %734 = vmatpush.msra.mxu0 0.0
    %735 = vmatpush.msra.mxu0 0.0
    %736 = vmatpush.msra.mxu0 0.0
    %737 = vmatpush.msra.mxu0 0.0
    %738 = vmatpush.msra.mxu0 0.0
    %739 = vmatpush.msra.mxu0 0.0
    %740 = vmatpush.msra.mxu0 0.0
    %741 = vmatpush.msra.mxu0 0.0
    %742 = vmatpush.msra.mxu0 0.0
    %743 = vmatpush.msra.mxu0 0.0
    %744 = vmatpush.msra.mxu0 0.0
    %745 = vmatpush.msra.mxu0 %v99
    %746 = vmatmul.f32.gmra.mxu0 %v728
    %v747 = vpop.f32.mrf.mxu0
    %v748 = vadd.f32 0.0, %v747
    %749 = vdwg.mxu0
    %v751 = vsel %vm611, %v605, 0
    %753 = vmatpush.msra.mxu0 0.0
    %754 = vmatpush.msra.mxu0 0.0
    %755 = vmatpush.msra.mxu0 0.0
    %756 = vmatpush.msra.mxu0 0.0
    %757 = vmatpush.msra.mxu0 0.0
    %758 = vmatpush.msra.mxu0 0.0
    %759 = vmatpush.msra.mxu0 0.0
    %760 = vmatpush.msra.mxu0 0.0
    %761 = vmatpush.msra.mxu0 0.0
    %762 = vmatpush.msra.mxu0 0.0
    %763 = vmatpush.msra.mxu0 0.0
    %764 = vmatpush.msra.mxu0 0.0
    %765 = vmatpush.msra.mxu0 0.0
    %766 = vmatpush.msra.mxu0 0.0
    %767 = vmatpush.msra.mxu0 0.0
    %768 = vmatpush.msra.mxu0 %v100
    %769 = vmatmul.f32.gmra.mxu0 %v751
    %v770 = vpop.f32.mrf.mxu0
    %v771 = vadd.f32 0.0, %v770
    %772 = vdwg.mxu0
    %v774 = vsel %vm611, %v606, 0
    %776 = vmatpush.msra.mxu0 0.0
    %777 = vmatpush.msra.mxu0 0.0
    %778 = vmatpush.msra.mxu0 0.0
    %779 = vmatpush.msra.mxu0 0.0
    %780 = vmatpush.msra.mxu0 0.0
    %781 = vmatpush.msra.mxu0 0.0
    %782 = vmatpush.msra.mxu0 0.0
    %783 = vmatpush.msra.mxu0 0.0
    %784 = vmatpush.msra.mxu0 0.0
    %785 = vmatpush.msra.mxu0 0.0
    %786 = vmatpush.msra.mxu0 0.0
    %787 = vmatpush.msra.mxu0 0.0
    %788 = vmatpush.msra.mxu0 0.0
    %789 = vmatpush.msra.mxu0 0.0
    %790 = vmatpush.msra.mxu0 0.0
    %791 = vmatpush.msra.mxu0 %v101
    %792 = vmatmul.f32.gmra.mxu0 %v774
    %v793 = vpop.f32.mrf.mxu0
    %v794 = vadd.f32 0.0, %v793
    %795 = vdwg.mxu0
    %v797 = vsel %vm611, %v607, 0
    %799 = vmatpush.msra.mxu0 0.0
    %800 = vmatpush.msra.mxu0 0.0
    %801 = vmatpush.msra.mxu0 0.0
    %802 = vmatpush.msra.mxu0 0.0
    %803 = vmatpush.msra.mxu0 0.0
    %804 = vmatpush.msra.mxu0 0.0
    %805 = vmatpush.msra.mxu0 0.0
    %806 = vmatpush.msra.mxu0 0.0
    %807 = vmatpush.msra.mxu0 0.0
    %808 = vmatpush.msra.mxu0 0.0
    %809 = vmatpush.msra.mxu0 0.0
    %810 = vmatpush.msra.mxu0 0.0
    %811 = vmatpush.msra.mxu0 0.0
    %812 = vmatpush.msra.mxu0 0.0
    %813 = vmatpush.msra.mxu0 0.0
    %814 = vmatpush.msra.mxu0 %v102
    %815 = vmatmul.f32.gmra.mxu0 %v797
    %v816 = vpop.f32.mrf.mxu0
    %v817 = vadd.f32 0.0, %v816
    %818 = vdwg.mxu0
    %v820 = vsel %vm611, %v608, 0
    %822 = vmatpush.msra.mxu0 0.0
    %823 = vmatpush.msra.mxu0 0.0
    %824 = vmatpush.msra.mxu0 0.0
    %825 = vmatpush.msra.mxu0 0.0
    %826 = vmatpush.msra.mxu0 0.0
    %827 = vmatpush.msra.mxu0 0.0
    %828 = vmatpush.msra.mxu0 0.0
    %829 = vmatpush.msra.mxu0 0.0
    %830 = vmatpush.msra.mxu0 0.0
    %831 = vmatpush.msra.mxu0 0.0
    %832 = vmatpush.msra.mxu0 0.0
    %833 = vmatpush.msra.mxu0 0.0
    %834 = vmatpush.msra.mxu0 0.0
    %835 = vmatpush.msra.mxu0 0.0
    %836 = vmatpush.msra.mxu0 0.0
    %837 = vmatpush.msra.mxu0 %v103
    %838 = vmatmul.f32.gmra.mxu0 %v820
    %v839 = vpop.f32.mrf.mxu0
    %v840 = vadd.f32 0.0, %v839
    %841 = vdwg.mxu0
    %v843 = vsel %vm611, %v609, 0
    %845 = vmatpush.msra.mxu0 0.0
    %846 = vmatpush.msra.mxu0 0.0
    %847 = vmatpush.msra.mxu0 0.0
    %848 = vmatpush.msra.mxu0 0.0
    %849 = vmatpush.msra.mxu0 0.0
    %850 = vmatpush.msra.mxu0 0.0
    %851 = vmatpush.msra.mxu0 0.0
    %852 = vmatpush.msra.mxu0 0.0
    %853 = vmatpush.msra.mxu0 0.0
    %854 = vmatpush.msra.mxu0 0.0
    %855 = vmatpush.msra.mxu0 0.0
    %856 = vmatpush.msra.mxu0 0.0
    %857 = vmatpush.msra.mxu0 0.0
    %858 = vmatpush.msra.mxu0 0.0
    %859 = vmatpush.msra.mxu0 0.0
    %860 = vmatpush.msra.mxu0 %v104
    %861 = vmatmul.f32.gmra.mxu0 %v843
    %v862 = vpop.f32.mrf.mxu0
    %v863 = vadd.f32 0.0, %v862
    %864 = vdwg.mxu0
    %v866 = vsel %vm611, %v610, 0
    %868 = vmatpush.msra.mxu0 0.0
    %869 = vmatpush.msra.mxu0 0.0
    %870 = vmatpush.msra.mxu0 0.0
    %871 = vmatpush.msra.mxu0 0.0
    %872 = vmatpush.msra.mxu0 0.0
    %873 = vmatpush.msra.mxu0 0.0
    %874 = vmatpush.msra.mxu0 0.0
    %875 = vmatpush.msra.mxu0 0.0
    %876 = vmatpush.msra.mxu0 0.0
    %877 = vmatpush.msra.mxu0 0.0
    %878 = vmatpush.msra.mxu0 0.0
    %879 = vmatpush.msra.mxu0 0.0
    %880 = vmatpush.msra.mxu0 0.0
    %881 = vmatpush.msra.mxu0 0.0
    %882 = vmatpush.msra.mxu0 0.0
    %883 = vmatpush.msra.mxu0 %v105
    %884 = vmatmul.f32.gmra.mxu0 %v866
    %v885 = vpop.f32.mrf.mxu0
    %v886 = vadd.f32 0.0, %v885
    %887 = vdwg.mxu0
    %v900 = vadd.f32 %v633, %v425
    %v901 = vadd.f32 %v656, %v432
    %v902 = vadd.f32 %v679, %v433
    %v903 = vadd.f32 %v702, %v434
    %v904 = vadd.f32 %v725, %v435
    %v905 = vadd.f32 %v748, %v436
    %v906 = vadd.f32 %v771, %v437
    %v907 = vadd.f32 %v794, %v438
    %v908 = vadd.f32 %v817, %v428
    %v909 = vadd.f32 %v840, %v439
    %v910 = vadd.f32 %v863, %v440
    %v911 = vadd.f32 %v886, %v441
    %v913 = vperm.slane %v114, 0
    %v915 = vadd.f32 %v900, %v913
    %v916 = vadd.f32 %v901, %v913
    %v917 = vadd.f32 %v902, %v913
    %v918 = vadd.f32 %v903, %v913
    %v919 = vadd.f32 %v904, %v913
    %v920 = vadd.f32 %v905, %v913
    %v921 = vadd.f32 %v906, %v913
    %v922 = vadd.f32 %v907, %v913
    %v923 = vadd.f32 %v908, %v913
    %v924 = vadd.f32 %v909, %v913
    %v925 = vadd.f32 %v910, %v913
    %v926 = vadd.f32 %v911, %v913
    %v939 = vrot.slane %v916, 7
    %vm940 = vcmask 1041409
    %v941 = vsel %vm940, %v939, %v915
    %v942 = vrot.slane %v917, 6
    %vm943 = vcmask 1042434
    %v944 = vsel %vm943, %v942, %v941
    %v945 = vrot.slane %v918, 5
    %vm946 = vcmask 1043459
    %v947 = vsel %vm946, %v945, %v944
    %v948 = vrot.slane %v919, 4
    %vm949 = vcmask 1044484
    %v950 = vsel %vm949, %v948, %v947
    %v951 = vrot.slane %v920, 3
    %vm952 = vcmask 1045509
    %v953 = vsel %vm952, %v951, %v950
    %v954 = vrot.slane %v921, 2
    %vm955 = vcmask 1046534
    %v956 = vsel %vm955, %v954, %v953
    %v957 = vrot.slane %v922, 1
    %vm958 = vcmask 1047559
    %v959 = vsel %vm958, %v957, %v956
    %v960 = vrot.slane %v924, 7
    %v961 = vsel %vm940, %v960, %v923
    %v962 = vrot.slane %v925, 6
    %v963 = vsel %vm943, %v962, %v961
    %v964 = vrot.slane %v926, 5
    %v965 = vsel %vm946, %v964, %v963
    %v966 = vsel %vm121, %v959, 0
    %v968 = vsel %vm121, %v965, 0
    %970 = vmatpush.msra.mxu0 0.0
    %971 = vmatpush.msra.mxu0 0.0
    %972 = vmatpush.msra.mxu0 0.0
    %973 = vmatpush.msra.mxu0 0.0
    %974 = vmatpush.msra.mxu0 0.0
    %975 = vmatpush.msra.mxu0 0.0
    %976 = vmatpush.msra.mxu0 0.0
    %977 = vmatpush.msra.mxu0 0.0
    %978 = vmatpush.msra.mxu0 0.0
    %979 = vmatpush.msra.mxu0 0.0
    %980 = vmatpush.msra.mxu0 0.0
    %981 = vmatpush.msra.mxu0 0.0
    %982 = vmatpush.msra.mxu0 %v113
    %983 = vmatpush.msra.mxu0 %v112
    %984 = vmatpush.msra.mxu0 %v111
    %985 = vmatpush.msra.mxu0 %v110
    %986 = vmatmul.f32.gmra.mxu0 %v966
    %v987 = vpop.f32.mrf.mxu0
    %v988 = vadd.f32 0.0, %v987
    %989 = vmatmul.f32.gmra.mxu0 %v968
    %v990 = vpop.f32.mrf.mxu0
    %v991 = vadd.f32 0.0, %v990
    %992 = vdwg.mxu0
    %v995 = vrot.slane %v988, 1
    %v996 = vrot.slane %v988, 2
    %v997 = vrot.slane %v988, 3
    %v998 = vrot.slane %v988, 4
    %v999 = vrot.slane %v988, 5
    %v1000 = vrot.slane %v988, 6
    %v1001 = vrot.slane %v988, 7
    %v1002 = vrot.slane %v991, 1
    %v1003 = vrot.slane %v991, 2
    %v1004 = vrot.slane %v991, 3
    %1005 = vset.pattern.permute.xlu0 32
    %1006 = vperm.xlu0 %1005, %v988
    %v1007 = vpop.permute.xlu0 %1006
    %v1009 = vperm.slane %v1007, 0
    %1010 = vset.pattern.permute.xlu0 32
    %1011 = vperm.xlu0 %1010, %v995
    %v1012 = vpop.permute.xlu0 %1011
    %v1014 = vperm.slane %v1012, 0
    %1015 = vset.pattern.permute.xlu0 32
    %1016 = vperm.xlu0 %1015, %v996
    %v1017 = vpop.permute.xlu0 %1016
    %v1019 = vperm.slane %v1017, 0
    %1020 = vset.pattern.permute.xlu0 32
    %1021 = vperm.xlu0 %1020, %v997
    %v1022 = vpop.permute.xlu0 %1021
    %v1024 = vperm.slane %v1022, 0
    %1025 = vset.pattern.permute.xlu0 32
    %1026 = vperm.xlu0 %1025, %v998
    %v1027 = vpop.permute.xlu0 %1026
    %v1029 = vperm.slane %v1027, 0
    %1030 = vset.pattern.permute.xlu0 32
    %1031 = vperm.xlu0 %1030, %v999
    %v1032 = vpop.permute.xlu0 %1031
    %v1034 = vperm.slane %v1032, 0
    %1035 = vset.pattern.permute.xlu0 32
    %1036 = vperm.xlu0 %1035, %v1000
    %v1037 = vpop.permute.xlu0 %1036
    %v1039 = vperm.slane %v1037, 0
    %1040 = vset.pattern.permute.xlu0 32
    %1041 = vperm.xlu0 %1040, %v1001
    %v1042 = vpop.permute.xlu0 %1041
    %v1044 = vperm.slane %v1042, 0
    %1045 = vset.pattern.permute.xlu0 32
    %1046 = vperm.xlu0 %1045, %v991
    %v1047 = vpop.permute.xlu0 %1046
    %v1049 = vperm.slane %v1047, 0
    %1050 = vset.pattern.permute.xlu0 32
    %1051 = vperm.xlu0 %1050, %v1002
    %v1052 = vpop.permute.xlu0 %1051
    %v1054 = vperm.slane %v1052, 0
    %1055 = vset.pattern.permute.xlu0 32
    %1056 = vperm.xlu0 %1055, %v1003
    %v1057 = vpop.permute.xlu0 %1056
    %v1059 = vperm.slane %v1057, 0
    %1060 = vset.pattern.permute.xlu0 32
    %1061 = vperm.xlu0 %1060, %v1004
    %v1062 = vpop.permute.xlu0 %1061
    %v1064 = vperm.slane %v1062, 0
    %v1065 = vadd.f32 %v146, %v1009
    %v1066 = vadd.f32 %v169, %v1014
    %v1067 = vadd.f32 %v192, %v1019
    %v1068 = vadd.f32 %v215, %v1024
    %v1069 = vadd.f32 %v238, %v1029
    %v1070 = vadd.f32 %v261, %v1034
    %v1071 = vadd.f32 %v284, %v1039
    %v1072 = vadd.f32 %v307, %v1044
    %v1073 = vadd.f32 %v330, %v1049
    %v1074 = vadd.f32 %v353, %v1054
    %v1075 = vadd.f32 %v376, %v1059
    %v1076 = vadd.f32 %v399, %v1064
    %v1077 = vtanh.pop %v1065
    %v1078 = vtanh.pop %v1066
    %v1079 = vtanh.pop %v1067
    %v1080 = vtanh.pop %v1068
    %v1081 = vtanh.pop %v1069
    %v1082 = vtanh.pop %v1070
    %v1083 = vtanh.pop %v1071
    %v1084 = vtanh.pop %v1072
    %v1085 = vtanh.pop %v1073
    %v1086 = vtanh.pop %v1074
    %v1087 = vtanh.pop %v1075
    %v1088 = vtanh.pop %v1076
    %v1089 = vmul.f32 %v1077, 1.442695
    %v1090 = vpow.pop %v1089
    %v1091 = vmul.f32 %v1078, 1.442695
    %v1092 = vpow.pop %v1091
    %v1093 = vmul.f32 %v1079, 1.442695
    %v1094 = vpow.pop %v1093
    %v1095 = vmul.f32 %v1080, 1.442695
    %v1096 = vpow.pop %v1095
    %v1097 = vmul.f32 %v1081, 1.442695
    %v1098 = vpow.pop %v1097
    %v1099 = vmul.f32 %v1082, 1.442695
    %v1100 = vpow.pop %v1099
    %v1101 = vmul.f32 %v1083, 1.442695
    %v1102 = vpow.pop %v1101
    %v1103 = vmul.f32 %v1084, 1.442695
    %v1104 = vpow.pop %v1103
    %v1105 = vmul.f32 %v1085, 1.442695
    %v1106 = vpow.pop %v1105
    %v1107 = vmul.f32 %v1086, 1.442695
    %v1108 = vpow.pop %v1107
    %v1109 = vmul.f32 %v1087, 1.442695
    %v1110 = vpow.pop %v1109
    %v1111 = vmul.f32 %v1088, 1.442695
    %v1112 = vpow.pop %v1111
    %v1113 = vsel %vm550, %v1090, 0.0
    %1114 = vadd.xlane.f32.xlu0 %v1113
    %v1115 = vpop.xlane.xlu0 %1114
    %v1116 = vsel %vm550, %v1092, 0.0
    %1117 = vadd.xlane.f32.xlu0 %v1116
    %v1118 = vpop.xlane.xlu0 %1117
    %v1119 = vsel %vm550, %v1094, 0.0
    %1120 = vadd.xlane.f32.xlu0 %v1119
    %v1121 = vpop.xlane.xlu0 %1120
    %v1122 = vsel %vm550, %v1096, 0.0
    %1123 = vadd.xlane.f32.xlu0 %v1122
    %v1124 = vpop.xlane.xlu0 %1123
    %v1125 = vsel %vm550, %v1098, 0.0
    %1126 = vadd.xlane.f32.xlu0 %v1125
    %v1127 = vpop.xlane.xlu0 %1126
    %v1128 = vsel %vm550, %v1100, 0.0
    %1129 = vadd.xlane.f32.xlu0 %v1128
    %v1130 = vpop.xlane.xlu0 %1129
    %v1131 = vsel %vm550, %v1102, 0.0
    %1132 = vadd.xlane.f32.xlu0 %v1131
    %v1133 = vpop.xlane.xlu0 %1132
    %v1134 = vsel %vm550, %v1104, 0.0
    %1135 = vadd.xlane.f32.xlu0 %v1134
    %v1136 = vpop.xlane.xlu0 %1135
    %v1137 = vsel %vm550, %v1106, 0.0
    %1138 = vadd.xlane.f32.xlu0 %v1137
    %v1139 = vpop.xlane.xlu0 %1138
    %v1140 = vsel %vm550, %v1108, 0.0
    %1141 = vadd.xlane.f32.xlu0 %v1140
    %v1142 = vpop.xlane.xlu0 %1141
    %v1143 = vsel %vm550, %v1110, 0.0
    %1144 = vadd.xlane.f32.xlu0 %v1143
    %v1145 = vpop.xlane.xlu0 %1144
    %v1146 = vsel %vm550, %v1112, 0.0
    %1147 = vadd.xlane.f32.xlu0 %v1146
    %v1148 = vpop.xlane.xlu0 %1147
    %v1149 = vrcp.pop %v1115
    %v1150 = vrcp.pop %v1118
    %v1151 = vrcp.pop %v1121
    %v1152 = vrcp.pop %v1124
    %v1153 = vrcp.pop %v1127
    %v1154 = vrcp.pop %v1130
    %v1155 = vrcp.pop %v1133
    %v1156 = vrcp.pop %v1136
    %v1157 = vrcp.pop %v1139
    %v1158 = vrcp.pop %v1142
    %v1159 = vrcp.pop %v1145
    %v1160 = vrcp.pop %v1148
    %v1161 = vmul.f32 %v1090, %v1149
    %v1162 = vmul.f32 %v1092, %v1150
    %v1163 = vmul.f32 %v1094, %v1151
    %v1164 = vmul.f32 %v1096, %v1152
    %v1165 = vmul.f32 %v1098, %v1153
    %v1166 = vmul.f32 %v1100, %v1154
    %v1167 = vmul.f32 %v1102, %v1155
    %v1168 = vmul.f32 %v1104, %v1156
    %v1169 = vmul.f32 %v1106, %v1157
    %v1170 = vmul.f32 %v1108, %v1158
    %v1171 = vmul.f32 %v1110, %v1159
    %v1172 = vmul.f32 %v1112, %v1160
    %v1174 = vsel %vm611, %v1161, 0
    %1176 = vmatpush.msra.mxu0 0.0
    %1177 = vmatpush.msra.mxu0 0.0
    %1178 = vmatpush.msra.mxu0 0.0
    %1179 = vmatpush.msra.mxu0 0.0
    %1180 = vmatpush.msra.mxu0 0.0
    %1181 = vmatpush.msra.mxu0 0.0
    %1182 = vmatpush.msra.mxu0 0.0
    %1183 = vmatpush.msra.mxu0 0.0
    %1184 = vmatpush.msra.mxu0 0.0
    %1185 = vmatpush.msra.mxu0 0.0
    %1186 = vmatpush.msra.mxu0 0.0
    %1187 = vmatpush.msra.mxu0 0.0
    %1188 = vmatpush.msra.mxu0 0.0
    %1189 = vmatpush.msra.mxu0 0.0
    %1190 = vmatpush.msra.mxu0 0.0
    %1191 = vmatpush.msra.mxu0 %v94
    %1192 = vmatmul.f32.gmra.mxu0 %v1174
    %v1193 = vpop.f32.mrf.mxu0
    %v1194 = vadd.f32 0.0, %v1193
    %1195 = vdwg.mxu0
    %v1197 = vsel %vm611, %v1162, 0
    %1199 = vmatpush.msra.mxu0 0.0
    %1200 = vmatpush.msra.mxu0 0.0
    %1201 = vmatpush.msra.mxu0 0.0
    %1202 = vmatpush.msra.mxu0 0.0
    %1203 = vmatpush.msra.mxu0 0.0
    %1204 = vmatpush.msra.mxu0 0.0
    %1205 = vmatpush.msra.mxu0 0.0
    %1206 = vmatpush.msra.mxu0 0.0
    %1207 = vmatpush.msra.mxu0 0.0
    %1208 = vmatpush.msra.mxu0 0.0
    %1209 = vmatpush.msra.mxu0 0.0
    %1210 = vmatpush.msra.mxu0 0.0
    %1211 = vmatpush.msra.mxu0 0.0
    %1212 = vmatpush.msra.mxu0 0.0
    %1213 = vmatpush.msra.mxu0 0.0
    %1214 = vmatpush.msra.mxu0 %v95
    %1215 = vmatmul.f32.gmra.mxu0 %v1197
    %v1216 = vpop.f32.mrf.mxu0
    %v1217 = vadd.f32 0.0, %v1216
    %1218 = vdwg.mxu0
    %v1220 = vsel %vm611, %v1163, 0
    %1222 = vmatpush.msra.mxu0 0.0
    %1223 = vmatpush.msra.mxu0 0.0
    %1224 = vmatpush.msra.mxu0 0.0
    %1225 = vmatpush.msra.mxu0 0.0
    %1226 = vmatpush.msra.mxu0 0.0
    %1227 = vmatpush.msra.mxu0 0.0
    %1228 = vmatpush.msra.mxu0 0.0
    %1229 = vmatpush.msra.mxu0 0.0
    %1230 = vmatpush.msra.mxu0 0.0
    %1231 = vmatpush.msra.mxu0 0.0
    %1232 = vmatpush.msra.mxu0 0.0
    %1233 = vmatpush.msra.mxu0 0.0
    %1234 = vmatpush.msra.mxu0 0.0
    %1235 = vmatpush.msra.mxu0 0.0
    %1236 = vmatpush.msra.mxu0 0.0
    %1237 = vmatpush.msra.mxu0 %v96
    %1238 = vmatmul.f32.gmra.mxu0 %v1220
    %v1239 = vpop.f32.mrf.mxu0
    %v1240 = vadd.f32 0.0, %v1239
    %1241 = vdwg.mxu0
    %v1243 = vsel %vm611, %v1164, 0
    %1245 = vmatpush.msra.mxu0 0.0
    %1246 = vmatpush.msra.mxu0 0.0
    %1247 = vmatpush.msra.mxu0 0.0
    %1248 = vmatpush.msra.mxu0 0.0
    %1249 = vmatpush.msra.mxu0 0.0
    %1250 = vmatpush.msra.mxu0 0.0
    %1251 = vmatpush.msra.mxu0 0.0
    %1252 = vmatpush.msra.mxu0 0.0
    %1253 = vmatpush.msra.mxu0 0.0
    %1254 = vmatpush.msra.mxu0 0.0
    %1255 = vmatpush.msra.mxu0 0.0
    %1256 = vmatpush.msra.mxu0 0.0
    %1257 = vmatpush.msra.mxu0 0.0
    %1258 = vmatpush.msra.mxu0 0.0
    %1259 = vmatpush.msra.mxu0 0.0
    %1260 = vmatpush.msra.mxu0 %v97
    %1261 = vmatmul.f32.gmra.mxu0 %v1243
    %v1262 = vpop.f32.mrf.mxu0
    %v1263 = vadd.f32 0.0, %v1262
    %1264 = vdwg.mxu0
    %v1266 = vsel %vm611, %v1165, 0
    %1268 = vmatpush.msra.mxu0 0.0
    %1269 = vmatpush.msra.mxu0 0.0
    %1270 = vmatpush.msra.mxu0 0.0
    %1271 = vmatpush.msra.mxu0 0.0
    %1272 = vmatpush.msra.mxu0 0.0
    %1273 = vmatpush.msra.mxu0 0.0
    %1274 = vmatpush.msra.mxu0 0.0
    %1275 = vmatpush.msra.mxu0 0.0
    %1276 = vmatpush.msra.mxu0 0.0
    %1277 = vmatpush.msra.mxu0 0.0
    %1278 = vmatpush.msra.mxu0 0.0
    %1279 = vmatpush.msra.mxu0 0.0
    %1280 = vmatpush.msra.mxu0 0.0
    %1281 = vmatpush.msra.mxu0 0.0
    %1282 = vmatpush.msra.mxu0 0.0
    %1283 = vmatpush.msra.mxu0 %v98
    %1284 = vmatmul.f32.gmra.mxu0 %v1266
    %v1285 = vpop.f32.mrf.mxu0
    %v1286 = vadd.f32 0.0, %v1285
    %1287 = vdwg.mxu0
    %v1289 = vsel %vm611, %v1166, 0
    %1291 = vmatpush.msra.mxu0 0.0
    %1292 = vmatpush.msra.mxu0 0.0
    %1293 = vmatpush.msra.mxu0 0.0
    %1294 = vmatpush.msra.mxu0 0.0
    %1295 = vmatpush.msra.mxu0 0.0
    %1296 = vmatpush.msra.mxu0 0.0
    %1297 = vmatpush.msra.mxu0 0.0
    %1298 = vmatpush.msra.mxu0 0.0
    %1299 = vmatpush.msra.mxu0 0.0
    %1300 = vmatpush.msra.mxu0 0.0
    %1301 = vmatpush.msra.mxu0 0.0
    %1302 = vmatpush.msra.mxu0 0.0
    %1303 = vmatpush.msra.mxu0 0.0
    %1304 = vmatpush.msra.mxu0 0.0
    %1305 = vmatpush.msra.mxu0 0.0
    %1306 = vmatpush.msra.mxu0 %v99
    %1307 = vmatmul.f32.gmra.mxu0 %v1289
    %v1308 = vpop.f32.mrf.mxu0
    %v1309 = vadd.f32 0.0, %v1308
    %1310 = vdwg.mxu0
    %v1312 = vsel %vm611, %v1167, 0
    %1314 = vmatpush.msra.mxu0 0.0
    %1315 = vmatpush.msra.mxu0 0.0
    %1316 = vmatpush.msra.mxu0 0.0
    %1317 = vmatpush.msra.mxu0 0.0
    %1318 = vmatpush.msra.mxu0 0.0
    %1319 = vmatpush.msra.mxu0 0.0
    %1320 = vmatpush.msra.mxu0 0.0
    %1321 = vmatpush.msra.mxu0 0.0
    %1322 = vmatpush.msra.mxu0 0.0
    %1323 = vmatpush.msra.mxu0 0.0
    %1324 = vmatpush.msra.mxu0 0.0
    %1325 = vmatpush.msra.mxu0 0.0
    %1326 = vmatpush.msra.mxu0 0.0
    %1327 = vmatpush.msra.mxu0 0.0
    %1328 = vmatpush.msra.mxu0 0.0
    %1329 = vmatpush.msra.mxu0 %v100
    %1330 = vmatmul.f32.gmra.mxu0 %v1312
    %v1331 = vpop.f32.mrf.mxu0
    %v1332 = vadd.f32 0.0, %v1331
    %1333 = vdwg.mxu0
    %v1335 = vsel %vm611, %v1168, 0
    %1337 = vmatpush.msra.mxu0 0.0
    %1338 = vmatpush.msra.mxu0 0.0
    %1339 = vmatpush.msra.mxu0 0.0
    %1340 = vmatpush.msra.mxu0 0.0
    %1341 = vmatpush.msra.mxu0 0.0
    %1342 = vmatpush.msra.mxu0 0.0
    %1343 = vmatpush.msra.mxu0 0.0
    %1344 = vmatpush.msra.mxu0 0.0
    %1345 = vmatpush.msra.mxu0 0.0
    %1346 = vmatpush.msra.mxu0 0.0
    %1347 = vmatpush.msra.mxu0 0.0
    %1348 = vmatpush.msra.mxu0 0.0
    %1349 = vmatpush.msra.mxu0 0.0
    %1350 = vmatpush.msra.mxu0 0.0
    %1351 = vmatpush.msra.mxu0 0.0
    %1352 = vmatpush.msra.mxu0 %v101
    %1353 = vmatmul.f32.gmra.mxu0 %v1335
    %v1354 = vpop.f32.mrf.mxu0
    %v1355 = vadd.f32 0.0, %v1354
    %1356 = vdwg.mxu0
    %v1358 = vsel %vm611, %v1169, 0
    %1360 = vmatpush.msra.mxu0 0.0
    %1361 = vmatpush.msra.mxu0 0.0
    %1362 = vmatpush.msra.mxu0 0.0
    %1363 = vmatpush.msra.mxu0 0.0
    %1364 = vmatpush.msra.mxu0 0.0
    %1365 = vmatpush.msra.mxu0 0.0
    %1366 = vmatpush.msra.mxu0 0.0
    %1367 = vmatpush.msra.mxu0 0.0
    %1368 = vmatpush.msra.mxu0 0.0
    %1369 = vmatpush.msra.mxu0 0.0
    %1370 = vmatpush.msra.mxu0 0.0
    %1371 = vmatpush.msra.mxu0 0.0
    %1372 = vmatpush.msra.mxu0 0.0
    %1373 = vmatpush.msra.mxu0 0.0
    %1374 = vmatpush.msra.mxu0 0.0
    %1375 = vmatpush.msra.mxu0 %v102
    %1376 = vmatmul.f32.gmra.mxu0 %v1358
    %v1377 = vpop.f32.mrf.mxu0
    %v1378 = vadd.f32 0.0, %v1377
    %1379 = vdwg.mxu0
    %v1381 = vsel %vm611, %v1170, 0
    %1383 = vmatpush.msra.mxu0 0.0
    %1384 = vmatpush.msra.mxu0 0.0
    %1385 = vmatpush.msra.mxu0 0.0
    %1386 = vmatpush.msra.mxu0 0.0
    %1387 = vmatpush.msra.mxu0 0.0
    %1388 = vmatpush.msra.mxu0 0.0
    %1389 = vmatpush.msra.mxu0 0.0
    %1390 = vmatpush.msra.mxu0 0.0
    %1391 = vmatpush.msra.mxu0 0.0
    %1392 = vmatpush.msra.mxu0 0.0
    %1393 = vmatpush.msra.mxu0 0.0
    %1394 = vmatpush.msra.mxu0 0.0
    %1395 = vmatpush.msra.mxu0 0.0
    %1396 = vmatpush.msra.mxu0 0.0
    %1397 = vmatpush.msra.mxu0 0.0
    %1398 = vmatpush.msra.mxu0 %v103
    %1399 = vmatmul.f32.gmra.mxu0 %v1381
    %v1400 = vpop.f32.mrf.mxu0
    %v1401 = vadd.f32 0.0, %v1400
    %1402 = vdwg.mxu0
    %v1404 = vsel %vm611, %v1171, 0
    %1406 = vmatpush.msra.mxu0 0.0
    %1407 = vmatpush.msra.mxu0 0.0
    %1408 = vmatpush.msra.mxu0 0.0
    %1409 = vmatpush.msra.mxu0 0.0
    %1410 = vmatpush.msra.mxu0 0.0
    %1411 = vmatpush.msra.mxu0 0.0
    %1412 = vmatpush.msra.mxu0 0.0
    %1413 = vmatpush.msra.mxu0 0.0
    %1414 = vmatpush.msra.mxu0 0.0
    %1415 = vmatpush.msra.mxu0 0.0
    %1416 = vmatpush.msra.mxu0 0.0
    %1417 = vmatpush.msra.mxu0 0.0
    %1418 = vmatpush.msra.mxu0 0.0
    %1419 = vmatpush.msra.mxu0 0.0
    %1420 = vmatpush.msra.mxu0 0.0
    %1421 = vmatpush.msra.mxu0 %v104
    %1422 = vmatmul.f32.gmra.mxu0 %v1404
    %v1423 = vpop.f32.mrf.mxu0
    %v1424 = vadd.f32 0.0, %v1423
    %1425 = vdwg.mxu0
    %v1427 = vsel %vm611, %v1172, 0
    %1429 = vmatpush.msra.mxu0 0.0
    %1430 = vmatpush.msra.mxu0 0.0
    %1431 = vmatpush.msra.mxu0 0.0
    %1432 = vmatpush.msra.mxu0 0.0
    %1433 = vmatpush.msra.mxu0 0.0
    %1434 = vmatpush.msra.mxu0 0.0
    %1435 = vmatpush.msra.mxu0 0.0
    %1436 = vmatpush.msra.mxu0 0.0
    %1437 = vmatpush.msra.mxu0 0.0
    %1438 = vmatpush.msra.mxu0 0.0
    %1439 = vmatpush.msra.mxu0 0.0
    %1440 = vmatpush.msra.mxu0 0.0
    %1441 = vmatpush.msra.mxu0 0.0
    %1442 = vmatpush.msra.mxu0 0.0
    %1443 = vmatpush.msra.mxu0 0.0
    %1444 = vmatpush.msra.mxu0 %v105
    %1445 = vmatmul.f32.gmra.mxu0 %v1427
    %v1446 = vpop.f32.mrf.mxu0
    %v1447 = vadd.f32 0.0, %v1446
    %1448 = vdwg.mxu0
    %v1461 = vadd.f32 %v1194, %v988
    %v1462 = vadd.f32 %v1217, %v995
    %v1463 = vadd.f32 %v1240, %v996
    %v1464 = vadd.f32 %v1263, %v997
    %v1465 = vadd.f32 %v1286, %v998
    %v1466 = vadd.f32 %v1309, %v999
    %v1467 = vadd.f32 %v1332, %v1000
    %v1468 = vadd.f32 %v1355, %v1001
    %v1469 = vadd.f32 %v1378, %v991
    %v1470 = vadd.f32 %v1401, %v1002
    %v1471 = vadd.f32 %v1424, %v1003
    %v1472 = vadd.f32 %v1447, %v1004
    %v1473 = vadd.f32 %v1461, %v913
    %v1474 = vadd.f32 %v1462, %v913
    %v1475 = vadd.f32 %v1463, %v913
    %v1476 = vadd.f32 %v1464, %v913
    %v1477 = vadd.f32 %v1465, %v913
    %v1478 = vadd.f32 %v1466, %v913
    %v1479 = vadd.f32 %v1467, %v913
    %v1480 = vadd.f32 %v1468, %v913
    %v1481 = vadd.f32 %v1469, %v913
    %v1482 = vadd.f32 %v1470, %v913
    %v1483 = vadd.f32 %v1471, %v913
    %v1484 = vadd.f32 %v1472, %v913
    %v1497 = vrot.slane %v1474, 7
    %v1498 = vsel %vm940, %v1497, %v1473
    %v1499 = vrot.slane %v1475, 6
    %v1500 = vsel %vm943, %v1499, %v1498
    %v1501 = vrot.slane %v1476, 5
    %v1502 = vsel %vm946, %v1501, %v1500
    %v1503 = vrot.slane %v1477, 4
    %v1504 = vsel %vm949, %v1503, %v1502
    %v1505 = vrot.slane %v1478, 3
    %v1506 = vsel %vm952, %v1505, %v1504
    %v1507 = vrot.slane %v1479, 2
    %v1508 = vsel %vm955, %v1507, %v1506
    %v1509 = vrot.slane %v1480, 1
    %v1510 = vsel %vm958, %v1509, %v1508
    %v1511 = vrot.slane %v1482, 7
    %v1512 = vsel %vm940, %v1511, %v1481
    %v1513 = vrot.slane %v1483, 6
    %v1514 = vsel %vm943, %v1513, %v1512
    %v1515 = vrot.slane %v1484, 5
    %v1516 = vsel %vm946, %v1515, %v1514
    %v1517 = vsel %vm121, %v1510, 0
    %v1519 = vsel %vm121, %v1516, 0
    %1521 = vmatpush.msra.mxu0 0.0
    %1522 = vmatpush.msra.mxu0 0.0
    %1523 = vmatpush.msra.mxu0 0.0
    %1524 = vmatpush.msra.mxu0 0.0
    %1525 = vmatpush.msra.mxu0 0.0
    %1526 = vmatpush.msra.mxu0 0.0
    %1527 = vmatpush.msra.mxu0 0.0
    %1528 = vmatpush.msra.mxu0 0.0
    %1529 = vmatpush.msra.mxu0 0.0
    %1530 = vmatpush.msra.mxu0 0.0
    %1531 = vmatpush.msra.mxu0 0.0
    %1532 = vmatpush.msra.mxu0 0.0
    %1533 = vmatpush.msra.mxu0 %v113
    %1534 = vmatpush.msra.mxu0 %v112
    %1535 = vmatpush.msra.mxu0 %v111
    %1536 = vmatpush.msra.mxu0 %v110
    %1537 = vmatmul.f32.gmra.mxu0 %v1517
    %v1538 = vpop.f32.mrf.mxu0
    %v1539 = vadd.f32 0.0, %v1538
    %1540 = vmatmul.f32.gmra.mxu0 %v1519
    %v1541 = vpop.f32.mrf.mxu0
    %v1542 = vadd.f32 0.0, %v1541
    %1543 = vdwg.mxu0
    %v1546 = vrot.slane %v1539, 1
    %v1547 = vrot.slane %v1539, 2
    %v1548 = vrot.slane %v1539, 3
    %v1549 = vrot.slane %v1539, 4
    %v1550 = vrot.slane %v1539, 5
    %v1551 = vrot.slane %v1539, 6
    %v1552 = vrot.slane %v1539, 7
    %v1553 = vrot.slane %v1542, 1
    %v1554 = vrot.slane %v1542, 2
    %v1555 = vrot.slane %v1542, 3
    %1556 = vset.pattern.permute.xlu0 32
    %1557 = vperm.xlu0 %1556, %v1539
    %v1558 = vpop.permute.xlu0 %1557
    %v1560 = vperm.slane %v1558, 0
    %1561 = vset.pattern.permute.xlu0 32
    %1562 = vperm.xlu0 %1561, %v1546
    %v1563 = vpop.permute.xlu0 %1562
    %v1565 = vperm.slane %v1563, 0
    %1566 = vset.pattern.permute.xlu0 32
    %1567 = vperm.xlu0 %1566, %v1547
    %v1568 = vpop.permute.xlu0 %1567
    %v1570 = vperm.slane %v1568, 0
    %1571 = vset.pattern.permute.xlu0 32
    %1572 = vperm.xlu0 %1571, %v1548
    %v1573 = vpop.permute.xlu0 %1572
    %v1575 = vperm.slane %v1573, 0
    %1576 = vset.pattern.permute.xlu0 32
    %1577 = vperm.xlu0 %1576, %v1549
    %v1578 = vpop.permute.xlu0 %1577
    %v1580 = vperm.slane %v1578, 0
    %1581 = vset.pattern.permute.xlu0 32
    %1582 = vperm.xlu0 %1581, %v1550
    %v1583 = vpop.permute.xlu0 %1582
    %v1585 = vperm.slane %v1583, 0
    %1586 = vset.pattern.permute.xlu0 32
    %1587 = vperm.xlu0 %1586, %v1551
    %v1588 = vpop.permute.xlu0 %1587
    %v1590 = vperm.slane %v1588, 0
    %1591 = vset.pattern.permute.xlu0 32
    %1592 = vperm.xlu0 %1591, %v1552
    %v1593 = vpop.permute.xlu0 %1592
    %v1595 = vperm.slane %v1593, 0
    %1596 = vset.pattern.permute.xlu0 32
    %1597 = vperm.xlu0 %1596, %v1542
    %v1598 = vpop.permute.xlu0 %1597
    %v1600 = vperm.slane %v1598, 0
    %1601 = vset.pattern.permute.xlu0 32
    %1602 = vperm.xlu0 %1601, %v1553
    %v1603 = vpop.permute.xlu0 %1602
    %v1605 = vperm.slane %v1603, 0
    %1606 = vset.pattern.permute.xlu0 32
    %1607 = vperm.xlu0 %1606, %v1554
    %v1608 = vpop.permute.xlu0 %1607
    %v1610 = vperm.slane %v1608, 0
    %1611 = vset.pattern.permute.xlu0 32
    %1612 = vperm.xlu0 %1611, %v1555
    %v1613 = vpop.permute.xlu0 %1612
    %v1615 = vperm.slane %v1613, 0
    %v1616 = vadd.f32 %v146, %v1560
    %v1617 = vadd.f32 %v169, %v1565
    %v1618 = vadd.f32 %v192, %v1570
    %v1619 = vadd.f32 %v215, %v1575
    %v1620 = vadd.f32 %v238, %v1580
    %v1621 = vadd.f32 %v261, %v1585
    %v1622 = vadd.f32 %v284, %v1590
    %v1623 = vadd.f32 %v307, %v1595
    %v1624 = vadd.f32 %v330, %v1600
    %v1625 = vadd.f32 %v353, %v1605
    %v1626 = vadd.f32 %v376, %v1610
    %v1627 = vadd.f32 %v399, %v1615
    %v1628 = vtanh.pop %v1616
    %v1629 = vtanh.pop %v1617
    %v1630 = vtanh.pop %v1618
    %v1631 = vtanh.pop %v1619
    %v1632 = vtanh.pop %v1620
    %v1633 = vtanh.pop %v1621
    %v1634 = vtanh.pop %v1622
    %v1635 = vtanh.pop %v1623
    %v1636 = vtanh.pop %v1624
    %v1637 = vtanh.pop %v1625
    %v1638 = vtanh.pop %v1626
    %v1639 = vtanh.pop %v1627
    %v1640 = vmul.f32 %v1628, 1.442695
    %v1641 = vpow.pop %v1640
    %v1642 = vmul.f32 %v1629, 1.442695
    %v1643 = vpow.pop %v1642
    %v1644 = vmul.f32 %v1630, 1.442695
    %v1645 = vpow.pop %v1644
    %v1646 = vmul.f32 %v1631, 1.442695
    %v1647 = vpow.pop %v1646
    %v1648 = vmul.f32 %v1632, 1.442695
    %v1649 = vpow.pop %v1648
    %v1650 = vmul.f32 %v1633, 1.442695
    %v1651 = vpow.pop %v1650
    %v1652 = vmul.f32 %v1634, 1.442695
    %v1653 = vpow.pop %v1652
    %v1654 = vmul.f32 %v1635, 1.442695
    %v1655 = vpow.pop %v1654
    %v1656 = vmul.f32 %v1636, 1.442695
    %v1657 = vpow.pop %v1656
    %v1658 = vmul.f32 %v1637, 1.442695
    %v1659 = vpow.pop %v1658
    %v1660 = vmul.f32 %v1638, 1.442695
    %v1661 = vpow.pop %v1660
    %v1662 = vmul.f32 %v1639, 1.442695
    %v1663 = vpow.pop %v1662
    %v1664 = vsel %vm550, %v1641, 0.0
    %1665 = vadd.xlane.f32.xlu0 %v1664
    %v1666 = vpop.xlane.xlu0 %1665
    %v1667 = vsel %vm550, %v1643, 0.0
    %1668 = vadd.xlane.f32.xlu0 %v1667
    %v1669 = vpop.xlane.xlu0 %1668
    %v1670 = vsel %vm550, %v1645, 0.0
    %1671 = vadd.xlane.f32.xlu0 %v1670
    %v1672 = vpop.xlane.xlu0 %1671
    %v1673 = vsel %vm550, %v1647, 0.0
    %1674 = vadd.xlane.f32.xlu0 %v1673
    %v1675 = vpop.xlane.xlu0 %1674
    %v1676 = vsel %vm550, %v1649, 0.0
    %1677 = vadd.xlane.f32.xlu0 %v1676
    %v1678 = vpop.xlane.xlu0 %1677
    %v1679 = vsel %vm550, %v1651, 0.0
    %1680 = vadd.xlane.f32.xlu0 %v1679
    %v1681 = vpop.xlane.xlu0 %1680
    %v1682 = vsel %vm550, %v1653, 0.0
    %1683 = vadd.xlane.f32.xlu0 %v1682
    %v1684 = vpop.xlane.xlu0 %1683
    %v1685 = vsel %vm550, %v1655, 0.0
    %1686 = vadd.xlane.f32.xlu0 %v1685
    %v1687 = vpop.xlane.xlu0 %1686
    %v1688 = vsel %vm550, %v1657, 0.0
    %1689 = vadd.xlane.f32.xlu0 %v1688
    %v1690 = vpop.xlane.xlu0 %1689
    %v1691 = vsel %vm550, %v1659, 0.0
    %1692 = vadd.xlane.f32.xlu0 %v1691
    %v1693 = vpop.xlane.xlu0 %1692
    %v1694 = vsel %vm550, %v1661, 0.0
    %1695 = vadd.xlane.f32.xlu0 %v1694
    %v1696 = vpop.xlane.xlu0 %1695
    %v1697 = vsel %vm550, %v1663, 0.0
    %1698 = vadd.xlane.f32.xlu0 %v1697
    %v1699 = vpop.xlane.xlu0 %1698
    %v1700 = vrcp.pop %v1666
    %v1701 = vrcp.pop %v1669
    %v1702 = vrcp.pop %v1672
    %v1703 = vrcp.pop %v1675
    %v1704 = vrcp.pop %v1678
    %v1705 = vrcp.pop %v1681
    %v1706 = vrcp.pop %v1684
    %v1707 = vrcp.pop %v1687
    %v1708 = vrcp.pop %v1690
    %v1709 = vrcp.pop %v1693
    %v1710 = vrcp.pop %v1696
    %v1711 = vrcp.pop %v1699
    %v1712 = vmul.f32 %v1641, %v1700
    %v1713 = vmul.f32 %v1643, %v1701
    %v1714 = vmul.f32 %v1645, %v1702
    %v1715 = vmul.f32 %v1647, %v1703
    %v1716 = vmul.f32 %v1649, %v1704
    %v1717 = vmul.f32 %v1651, %v1705
    %v1718 = vmul.f32 %v1653, %v1706
    %v1719 = vmul.f32 %v1655, %v1707
    %v1720 = vmul.f32 %v1657, %v1708
    %v1721 = vmul.f32 %v1659, %v1709
    %v1722 = vmul.f32 %v1661, %v1710
    %v1723 = vmul.f32 %v1663, %v1711
    %v1725 = vsel %vm611, %v1712, 0
    %1727 = vmatpush.msra.mxu0 0.0
    %1728 = vmatpush.msra.mxu0 0.0
    %1729 = vmatpush.msra.mxu0 0.0
    %1730 = vmatpush.msra.mxu0 0.0
    %1731 = vmatpush.msra.mxu0 0.0
    %1732 = vmatpush.msra.mxu0 0.0
    %1733 = vmatpush.msra.mxu0 0.0
    %1734 = vmatpush.msra.mxu0 0.0
    %1735 = vmatpush.msra.mxu0 0.0
    %1736 = vmatpush.msra.mxu0 0.0
    %1737 = vmatpush.msra.mxu0 0.0
    %1738 = vmatpush.msra.mxu0 0.0
    %1739 = vmatpush.msra.mxu0 0.0
    %1740 = vmatpush.msra.mxu0 0.0
    %1741 = vmatpush.msra.mxu0 0.0
    %1742 = vmatpush.msra.mxu0 %v94
    %1743 = vmatmul.f32.gmra.mxu0 %v1725
    %v1744 = vpop.f32.mrf.mxu0
    %v1745 = vadd.f32 0.0, %v1744
    %1746 = vdwg.mxu0
    %v1748 = vsel %vm611, %v1713, 0
    %1750 = vmatpush.msra.mxu0 0.0
    %1751 = vmatpush.msra.mxu0 0.0
    %1752 = vmatpush.msra.mxu0 0.0
    %1753 = vmatpush.msra.mxu0 0.0
    %1754 = vmatpush.msra.mxu0 0.0
    %1755 = vmatpush.msra.mxu0 0.0
    %1756 = vmatpush.msra.mxu0 0.0
    %1757 = vmatpush.msra.mxu0 0.0
    %1758 = vmatpush.msra.mxu0 0.0
    %1759 = vmatpush.msra.mxu0 0.0
    %1760 = vmatpush.msra.mxu0 0.0
    %1761 = vmatpush.msra.mxu0 0.0
    %1762 = vmatpush.msra.mxu0 0.0
    %1763 = vmatpush.msra.mxu0 0.0
    %1764 = vmatpush.msra.mxu0 0.0
    %1765 = vmatpush.msra.mxu0 %v95
    %1766 = vmatmul.f32.gmra.mxu0 %v1748
    %v1767 = vpop.f32.mrf.mxu0
    %v1768 = vadd.f32 0.0, %v1767
    %1769 = vdwg.mxu0
    %v1771 = vsel %vm611, %v1714, 0
    %1773 = vmatpush.msra.mxu0 0.0
    %1774 = vmatpush.msra.mxu0 0.0
    %1775 = vmatpush.msra.mxu0 0.0
    %1776 = vmatpush.msra.mxu0 0.0
    %1777 = vmatpush.msra.mxu0 0.0
    %1778 = vmatpush.msra.mxu0 0.0
    %1779 = vmatpush.msra.mxu0 0.0
    %1780 = vmatpush.msra.mxu0 0.0
    %1781 = vmatpush.msra.mxu0 0.0
    %1782 = vmatpush.msra.mxu0 0.0
    %1783 = vmatpush.msra.mxu0 0.0
    %1784 = vmatpush.msra.mxu0 0.0
    %1785 = vmatpush.msra.mxu0 0.0
    %1786 = vmatpush.msra.mxu0 0.0
    %1787 = vmatpush.msra.mxu0 0.0
    %1788 = vmatpush.msra.mxu0 %v96
    %1789 = vmatmul.f32.gmra.mxu0 %v1771
    %v1790 = vpop.f32.mrf.mxu0
    %v1791 = vadd.f32 0.0, %v1790
    %1792 = vdwg.mxu0
    %v1794 = vsel %vm611, %v1715, 0
    %1796 = vmatpush.msra.mxu0 0.0
    %1797 = vmatpush.msra.mxu0 0.0
    %1798 = vmatpush.msra.mxu0 0.0
    %1799 = vmatpush.msra.mxu0 0.0
    %1800 = vmatpush.msra.mxu0 0.0
    %1801 = vmatpush.msra.mxu0 0.0
    %1802 = vmatpush.msra.mxu0 0.0
    %1803 = vmatpush.msra.mxu0 0.0
    %1804 = vmatpush.msra.mxu0 0.0
    %1805 = vmatpush.msra.mxu0 0.0
    %1806 = vmatpush.msra.mxu0 0.0
    %1807 = vmatpush.msra.mxu0 0.0
    %1808 = vmatpush.msra.mxu0 0.0
    %1809 = vmatpush.msra.mxu0 0.0
    %1810 = vmatpush.msra.mxu0 0.0
    %1811 = vmatpush.msra.mxu0 %v97
    %1812 = vmatmul.f32.gmra.mxu0 %v1794
    %v1813 = vpop.f32.mrf.mxu0
    %v1814 = vadd.f32 0.0, %v1813
    %1815 = vdwg.mxu0
    %v1817 = vsel %vm611, %v1716, 0
    %1819 = vmatpush.msra.mxu0 0.0
    %1820 = vmatpush.msra.mxu0 0.0
    %1821 = vmatpush.msra.mxu0 0.0
    %1822 = vmatpush.msra.mxu0 0.0
    %1823 = vmatpush.msra.mxu0 0.0
    %1824 = vmatpush.msra.mxu0 0.0
    %1825 = vmatpush.msra.mxu0 0.0
    %1826 = vmatpush.msra.mxu0 0.0
    %1827 = vmatpush.msra.mxu0 0.0
    %1828 = vmatpush.msra.mxu0 0.0
    %1829 = vmatpush.msra.mxu0 0.0
    %1830 = vmatpush.msra.mxu0 0.0
    %1831 = vmatpush.msra.mxu0 0.0
    %1832 = vmatpush.msra.mxu0 0.0
    %1833 = vmatpush.msra.mxu0 0.0
    %1834 = vmatpush.msra.mxu0 %v98
    %1835 = vmatmul.f32.gmra.mxu0 %v1817
    %v1836 = vpop.f32.mrf.mxu0
    %v1837 = vadd.f32 0.0, %v1836
    %1838 = vdwg.mxu0
    %v1840 = vsel %vm611, %v1717, 0
    %1842 = vmatpush.msra.mxu0 0.0
    %1843 = vmatpush.msra.mxu0 0.0
    %1844 = vmatpush.msra.mxu0 0.0
    %1845 = vmatpush.msra.mxu0 0.0
    %1846 = vmatpush.msra.mxu0 0.0
    %1847 = vmatpush.msra.mxu0 0.0
    %1848 = vmatpush.msra.mxu0 0.0
    %1849 = vmatpush.msra.mxu0 0.0
    %1850 = vmatpush.msra.mxu0 0.0
    %1851 = vmatpush.msra.mxu0 0.0
    %1852 = vmatpush.msra.mxu0 0.0
    %1853 = vmatpush.msra.mxu0 0.0
    %1854 = vmatpush.msra.mxu0 0.0
    %1855 = vmatpush.msra.mxu0 0.0
    %1856 = vmatpush.msra.mxu0 0.0
    %1857 = vmatpush.msra.mxu0 %v99
    %1858 = vmatmul.f32.gmra.mxu0 %v1840
    %v1859 = vpop.f32.mrf.mxu0
    %v1860 = vadd.f32 0.0, %v1859
    %1861 = vdwg.mxu0
    %v1863 = vsel %vm611, %v1718, 0
    %1865 = vmatpush.msra.mxu0 0.0
    %1866 = vmatpush.msra.mxu0 0.0
    %1867 = vmatpush.msra.mxu0 0.0
    %1868 = vmatpush.msra.mxu0 0.0
    %1869 = vmatpush.msra.mxu0 0.0
    %1870 = vmatpush.msra.mxu0 0.0
    %1871 = vmatpush.msra.mxu0 0.0
    %1872 = vmatpush.msra.mxu0 0.0
    %1873 = vmatpush.msra.mxu0 0.0
    %1874 = vmatpush.msra.mxu0 0.0
    %1875 = vmatpush.msra.mxu0 0.0
    %1876 = vmatpush.msra.mxu0 0.0
    %1877 = vmatpush.msra.mxu0 0.0
    %1878 = vmatpush.msra.mxu0 0.0
    %1879 = vmatpush.msra.mxu0 0.0
    %1880 = vmatpush.msra.mxu0 %v100
    %1881 = vmatmul.f32.gmra.mxu0 %v1863
    %v1882 = vpop.f32.mrf.mxu0
    %v1883 = vadd.f32 0.0, %v1882
    %1884 = vdwg.mxu0
    %v1886 = vsel %vm611, %v1719, 0
    %1888 = vmatpush.msra.mxu0 0.0
    %1889 = vmatpush.msra.mxu0 0.0
    %1890 = vmatpush.msra.mxu0 0.0
    %1891 = vmatpush.msra.mxu0 0.0
    %1892 = vmatpush.msra.mxu0 0.0
    %1893 = vmatpush.msra.mxu0 0.0
    %1894 = vmatpush.msra.mxu0 0.0
    %1895 = vmatpush.msra.mxu0 0.0
    %1896 = vmatpush.msra.mxu0 0.0
    %1897 = vmatpush.msra.mxu0 0.0
    %1898 = vmatpush.msra.mxu0 0.0
    %1899 = vmatpush.msra.mxu0 0.0
    %1900 = vmatpush.msra.mxu0 0.0
    %1901 = vmatpush.msra.mxu0 0.0
    %1902 = vmatpush.msra.mxu0 0.0
    %1903 = vmatpush.msra.mxu0 %v101
    %1904 = vmatmul.f32.gmra.mxu0 %v1886
    %v1905 = vpop.f32.mrf.mxu0
    %v1906 = vadd.f32 0.0, %v1905
    %1907 = vdwg.mxu0
    %v1909 = vsel %vm611, %v1720, 0
    %1911 = vmatpush.msra.mxu0 0.0
    %1912 = vmatpush.msra.mxu0 0.0
    %1913 = vmatpush.msra.mxu0 0.0
    %1914 = vmatpush.msra.mxu0 0.0
    %1915 = vmatpush.msra.mxu0 0.0
    %1916 = vmatpush.msra.mxu0 0.0
    %1917 = vmatpush.msra.mxu0 0.0
    %1918 = vmatpush.msra.mxu0 0.0
    %1919 = vmatpush.msra.mxu0 0.0
    %1920 = vmatpush.msra.mxu0 0.0
    %1921 = vmatpush.msra.mxu0 0.0
    %1922 = vmatpush.msra.mxu0 0.0
    %1923 = vmatpush.msra.mxu0 0.0
    %1924 = vmatpush.msra.mxu0 0.0
    %1925 = vmatpush.msra.mxu0 0.0
    %1926 = vmatpush.msra.mxu0 %v102
    %1927 = vmatmul.f32.gmra.mxu0 %v1909
    %v1928 = vpop.f32.mrf.mxu0
    %v1929 = vadd.f32 0.0, %v1928
    %1930 = vdwg.mxu0
    %v1932 = vsel %vm611, %v1721, 0
    %1934 = vmatpush.msra.mxu0 0.0
    %1935 = vmatpush.msra.mxu0 0.0
    %1936 = vmatpush.msra.mxu0 0.0
    %1937 = vmatpush.msra.mxu0 0.0
    %1938 = vmatpush.msra.mxu0 0.0
    %1939 = vmatpush.msra.mxu0 0.0
    %1940 = vmatpush.msra.mxu0 0.0
    %1941 = vmatpush.msra.mxu0 0.0
    %1942 = vmatpush.msra.mxu0 0.0
    %1943 = vmatpush.msra.mxu0 0.0
    %1944 = vmatpush.msra.mxu0 0.0
    %1945 = vmatpush.msra.mxu0 0.0
    %1946 = vmatpush.msra.mxu0 0.0
    %1947 = vmatpush.msra.mxu0 0.0
    %1948 = vmatpush.msra.mxu0 0.0
    %1949 = vmatpush.msra.mxu0 %v103
    %1950 = vmatmul.f32.gmra.mxu0 %v1932
    %v1951 = vpop.f32.mrf.mxu0
    %v1952 = vadd.f32 0.0, %v1951
    %1953 = vdwg.mxu0
    %v1955 = vsel %vm611, %v1722, 0
    %1957 = vmatpush.msra.mxu0 0.0
    %1958 = vmatpush.msra.mxu0 0.0
    %1959 = vmatpush.msra.mxu0 0.0
    %1960 = vmatpush.msra.mxu0 0.0
    %1961 = vmatpush.msra.mxu0 0.0
    %1962 = vmatpush.msra.mxu0 0.0
    %1963 = vmatpush.msra.mxu0 0.0
    %1964 = vmatpush.msra.mxu0 0.0
    %1965 = vmatpush.msra.mxu0 0.0
    %1966 = vmatpush.msra.mxu0 0.0
    %1967 = vmatpush.msra.mxu0 0.0
    %1968 = vmatpush.msra.mxu0 0.0
    %1969 = vmatpush.msra.mxu0 0.0
    %1970 = vmatpush.msra.mxu0 0.0
    %1971 = vmatpush.msra.mxu0 0.0
    %1972 = vmatpush.msra.mxu0 %v104
    %1973 = vmatmul.f32.gmra.mxu0 %v1955
    %v1974 = vpop.f32.mrf.mxu0
    %v1975 = vadd.f32 0.0, %v1974
    %1976 = vdwg.mxu0
    %v1978 = vsel %vm611, %v1723, 0
    %1980 = vmatpush.msra.mxu0 0.0
    %1981 = vmatpush.msra.mxu0 0.0
    %1982 = vmatpush.msra.mxu0 0.0
    %1983 = vmatpush.msra.mxu0 0.0
    %1984 = vmatpush.msra.mxu0 0.0
    %1985 = vmatpush.msra.mxu0 0.0
    %1986 = vmatpush.msra.mxu0 0.0
    %1987 = vmatpush.msra.mxu0 0.0
    %1988 = vmatpush.msra.mxu0 0.0
    %1989 = vmatpush.msra.mxu0 0.0
    %1990 = vmatpush.msra.mxu0 0.0
    %1991 = vmatpush.msra.mxu0 0.0
    %1992 = vmatpush.msra.mxu0 0.0
    %1993 = vmatpush.msra.mxu0 0.0
    %1994 = vmatpush.msra.mxu0 0.0
    %1995 = vmatpush.msra.mxu0 %v105
    %1996 = vmatmul.f32.gmra.mxu0 %v1978
    %v1997 = vpop.f32.mrf.mxu0
    %v1998 = vadd.f32 0.0, %v1997
    %1999 = vdwg.mxu0
    %v2012 = vadd.f32 %v1745, %v1539
    %v2013 = vadd.f32 %v1768, %v1546
    %v2014 = vadd.f32 %v1791, %v1547
    %v2015 = vadd.f32 %v1814, %v1548
    %v2016 = vadd.f32 %v1837, %v1549
    %v2017 = vadd.f32 %v1860, %v1550
    %v2018 = vadd.f32 %v1883, %v1551
    %v2019 = vadd.f32 %v1906, %v1552
    %v2020 = vadd.f32 %v1929, %v1542
    %v2021 = vadd.f32 %v1952, %v1553
    %v2022 = vadd.f32 %v1975, %v1554
    %v2023 = vadd.f32 %v1998, %v1555
    %v2024 = vadd.f32 %v2012, %v913
    %v2025 = vadd.f32 %v2013, %v913
    %v2026 = vadd.f32 %v2014, %v913
    %v2027 = vadd.f32 %v2015, %v913
    %v2028 = vadd.f32 %v2016, %v913
    %v2029 = vadd.f32 %v2017, %v913
    %v2030 = vadd.f32 %v2018, %v913
    %v2031 = vadd.f32 %v2019, %v913
    %v2032 = vadd.f32 %v2020, %v913
    %v2033 = vadd.f32 %v2021, %v913
    %v2034 = vadd.f32 %v2022, %v913
    %v2035 = vadd.f32 %v2023, %v913
    %v2037 = vperm.slane %v119, 0
    %v2051 = vrot.slane %v2025, 7
    %v2052 = vsel %vm940, %v2051, %v2024
    %v2053 = vrot.slane %v2026, 6
    %v2054 = vsel %vm943, %v2053, %v2052
    %v2055 = vrot.slane %v2027, 5
    %v2056 = vsel %vm946, %v2055, %v2054
    %v2057 = vrot.slane %v2028, 4
    %v2058 = vsel %vm949, %v2057, %v2056
    %v2059 = vrot.slane %v2029, 3
    %v2060 = vsel %vm952, %v2059, %v2058
    %v2061 = vrot.slane %v2030, 2
    %v2062 = vsel %vm955, %v2061, %v2060
    %v2063 = vrot.slane %v2031, 1
    %v2064 = vsel %vm958, %v2063, %v2062
    %v2065 = vrot.slane %v2033, 7
    %v2066 = vsel %vm940, %v2065, %v2032
    %v2067 = vrot.slane %v2034, 6
    %v2068 = vsel %vm943, %v2067, %v2066
    %v2069 = vrot.slane %v2035, 5
    %v2070 = vsel %vm946, %v2069, %v2068
    %v2071 = vsel %vm121, %v2064, 0
    %v2073 = vsel %vm121, %v2070, 0
    %2075 = vmatpush.msra.mxu0 0.0
    %2076 = vmatpush.msra.mxu0 0.0
    %2077 = vmatpush.msra.mxu0 0.0
    %2078 = vmatpush.msra.mxu0 0.0
    %2079 = vmatpush.msra.mxu0 0.0
    %2080 = vmatpush.msra.mxu0 0.0
    %2081 = vmatpush.msra.mxu0 0.0
    %2082 = vmatpush.msra.mxu0 0.0
    %2083 = vmatpush.msra.mxu0 0.0
    %2084 = vmatpush.msra.mxu0 0.0
    %2085 = vmatpush.msra.mxu0 0.0
    %2086 = vmatpush.msra.mxu0 0.0
    %2087 = vmatpush.msra.mxu0 %v118
    %2088 = vmatpush.msra.mxu0 %v117
    %2089 = vmatpush.msra.mxu0 %v116
    %2090 = vmatpush.msra.mxu0 %v115
    %2091 = vmatmul.f32.gmra.mxu0 %v2071
    %v2092 = vpop.f32.mrf.mxu0
    %v2093 = vadd.f32 %v2037, %v2092
    %2094 = vmatmul.f32.gmra.mxu0 %v2073
    %v2095 = vpop.f32.mrf.mxu0
    %v2096 = vadd.f32 %v2037, %v2095
    %2097 = vdwg.mxu0
    %2098 = vst [vmem:[#allocation11] sm:$0xff] %v2093
    %2099 = vst [vmem:[#allocation11 + $0x8] sm:$0xf] %v2096
    // Predicated region
    $region50: #{tpu_custom_call.1} parent=1 // pred_check
      _
    $region51: #{tpu_custom_call.1} parent=1 // pred_check_branch
      %2101 = sbr.rel (0) target = $region53
    $region52: #{tpu_custom_call.1} parent=1 // pred_region
      %2103 = vsyncadd [#allocation5], 0
      %s2104 = sshll.u32 [#allocation11], 4
      %s2105 = int_to_ptr.vmem [resolvable:$true] %s2104
      %s2106 = sshll.u32 %s8, 4
      %s2107 = int_to_ptr.hbm [resolvable:$true] %s2106
      %2112 = dma.vmem_to_hbm [thread:$0]  %s2105, 256, %s2107, [#allocation5], 128, 128, 8
    $region53: #{tpu_custom_call.1} parent=1 // pred_fallthru
      _
    // Predicated region
    $region54: #{tpu_custom_call.1} parent=1 // pred_check
      _
    $region55: #{tpu_custom_call.1} parent=1 // pred_check_branch
      %2114 = sbr.rel (0) target = $region57
    $region56: #{tpu_custom_call.1} parent=1 // pred_region
      %2116 = dma.done [#allocation5], 256
    $region57: #{tpu_custom_call.1} parent=1 // pred_fallthru
      _
    %2117 = vsyncpa [#allocation4], 1
    %2118 = vsyncpa [#allocation7], 1
    %2119 = vsyncpa [#allocation10], 1
    %2120 = vsyncpa [#allocation5], 1

</llo_original>
